<compile_context>
chip_gen: v6e
topology: v6e:2x2x1
jax: 0.10.0
libtpu: 0.0.40
codegen_flags: <defaults>
</compile_context>

<pallas_src>
import functools

import jax
import jax.numpy as jnp
from jax.experimental import pallas as pl
from jax.experimental.pallas import tpu as pltpu


_BN_EPS = 1e-5
_VMEM_LIMIT_CACHE = None


def _round_up(x, m):
    return -(-x // m) * m


def _get_vmem_limit():
    """Generation-aware scoped-VMEM limit (32 MiB on v7x, 64 MiB on v5e/v6e)."""
    global _VMEM_LIMIT_CACHE
    if _VMEM_LIMIT_CACHE is None:
        try:
            phys = int(pltpu.get_tpu_info().vmem_capacity_bytes)
        except Exception:
            phys = 64 * 1024 * 1024
        _VMEM_LIMIT_CACHE = int(min(max(phys // 2, 32 * 1024 * 1024),
                                    96 * 1024 * 1024))
    return _VMEM_LIMIT_CACHE


# ----------------------------------------------------------------------------
# Plain-JAX glue: RI feature construction (sort / data-dependent gathers).
# TODO(synk): the argsort + gather-heavy geometric feature construction has no
# clean Pallas equivalent and stays in plain JAX.
# ----------------------------------------------------------------------------
def index_points(points, idx):
    """points: [B, N, C], idx: [B, ...] int -> [B, ..., C]."""
    return jax.vmap(lambda p, i: p[i])(points, idx)


def order_index(xyz, new_xyz, new_norm, idx):
    """xyz: [B,S,K,3], new_xyz: [B,S,3], new_norm: [B,S,3,1], idx: [B,S,K]."""
    B, S, C = new_xyz.shape
    K = xyz.shape[2]
    grouped_xyz_local = xyz
    dist_plane = jnp.matmul(grouped_xyz_local, new_norm)                  # [B,S,K,1]
    proj_xyz = grouped_xyz_local - dist_plane * jnp.reshape(new_norm, (B, S, 1, C))
    proj_len = jnp.linalg.norm(proj_xyz, axis=-1, keepdims=True)          # [B,S,K,1]
    proj_unit = proj_xyz / proj_len
    proj_unit = jnp.where(jnp.isnan(proj_unit), 0.0, proj_unit)
    length_max_idx = jnp.argmax(proj_len, axis=2)                         # [B,S,1]
    vec_ref = jnp.take_along_axis(
        proj_unit, jnp.broadcast_to(length_max_idx[..., None], (B, S, 1, C)), axis=2
    )                                                                     # [B,S,1,3]
    dots = jnp.matmul(proj_unit, jnp.reshape(vec_ref, (B, S, C, 1)))      # [B,S,K,1]
    sign = jnp.cross(proj_unit, jnp.broadcast_to(vec_ref, (B, S, K, C)))  # [B,S,K,3]
    sign = jnp.matmul(sign, new_norm)                                     # [B,S,K,1]
    sign = jnp.sign(sign)
    sign = sign.at[:, :, 0, 0].set(1.0)
    dots = sign * dots - (1.0 - sign)
    order = jnp.argsort(-dots[..., 0], axis=2)                            # descending
    dots_sorted = jnp.take_along_axis(dots, order[..., None], axis=2)     # [B,S,K,1]
    idx_ordered = jnp.take_along_axis(idx, order, axis=2)                 # [B,S,K]
    return dots_sorted, idx_ordered


def ri_features(xyz, centers, center_norms, idx, pts, norm_ori):
    """Returns ri_feat [B,S,K,8] and idx_ordered [B,S,K]."""
    B, S, C = centers.shape
    new_norm = center_norms[..., None]                                    # [B,S,3,1]
    dots_sorted, idx_ordered = order_index(xyz, centers, new_norm, idx)
    eps = 1e-7

    grouped_xyz = index_points(pts, idx_ordered)                          # [B,S,K,3]
    grouped_local = grouped_xyz - centers[:, :, None, :]
    grouped_len = jnp.linalg.norm(grouped_local, axis=-1, keepdims=True)
    grouped_unit = grouped_local / grouped_len
    grouped_unit = jnp.where(jnp.isnan(grouped_unit), 0.0, grouped_unit)
    grouped_norm = index_points(norm_ori, idx_ordered)                    # [B,S,K,3]

    angle_0 = jnp.matmul(grouped_unit, new_norm)
    angle_1 = jnp.sum(grouped_unit * grouped_norm, axis=-1, keepdims=True)
    angle_norm = jnp.arccos(
        jnp.clip(jnp.matmul(grouped_norm, new_norm), -1.0 + eps, 1.0 - eps))
    # NOTE: in the reference, D_0 is a torch.bool tensor and `D_0[D_0 == 0] = -1`
    # writes bool(-1)=True, so `D_0.float()` is all-ones -> the multiply is a
    # no-op under modern PyTorch.  Reproduced literally (angle_norm unchanged).

    inner_vec = grouped_local - jnp.roll(grouped_local, 1, axis=2)
    inner_len = jnp.linalg.norm(inner_vec, axis=-1, keepdims=True)
    inner_unit = inner_vec / inner_len
    inner_unit = jnp.where(jnp.isnan(inner_unit), 0.0, inner_unit)
    inner_angle_0 = jnp.sum(inner_unit * grouped_norm, axis=-1, keepdims=True)
    inner_angle_1 = jnp.sum(inner_unit * jnp.roll(grouped_norm, 1, axis=2),
                            axis=-1, keepdims=True)
    inner_angle_2 = jnp.arccos(
        jnp.clip(jnp.sum(grouped_norm * jnp.roll(grouped_norm, 1, axis=2),
                         axis=-1, keepdims=True), -1.0 + eps, 1.0 - eps))
    # NOTE: same torch.bool quirk for D_1 -> no-op multiply (reproduced literally).

    proj_inner = dots_sorted - jnp.roll(dots_sorted, 1, axis=2)
    proj_inner = proj_inner.at[:, :, 0, 0].set(-3.0 - dots_sorted[:, :, -1, 0])

    ri_feat = jnp.concatenate(
        [grouped_len, proj_inner, angle_0, angle_1, angle_norm,
         inner_angle_0, inner_angle_1, inner_angle_2], axis=-1)           # [B,S,K,8]
    return ri_feat, idx_ordered


# ----------------------------------------------------------------------------
# Tile selection
# ----------------------------------------------------------------------------
def _pick_tile_rows(vmem_limit, c_pair_max):
    """Rows per grid step from the VMEM budget.

    Per-row footprint of a layer step:
      bf16 in + out blocks, double buffered : (c_in + c_out) * 2 B * 2
      f32 intermediates (h and z)           : (c_in + c_out) * 4 B
    => ~8 B per (row, channel) of (c_in + c_out).  Keep ~half the scoped
    limit for weights / affine / slack.
    """
    budget = vmem_limit // 2
    rows = budget // max(8, c_pair_max * 8)
    return int(min(max(rows, 1024), 32768))


def _pick_group_tile(G, K, target_rows):
    """Groups-per-tile (TG) and padded group count; blocks stay (8,128)-legal
    and padding is bounded (balanced tiles instead of round-down)."""
    tg_max = max(1, target_rows // K)
    tg_max = min(tg_max, G)
    n_tiles = -(-G // tg_max)                     # ceil
    tg = -(-G // n_tiles)                         # balanced groups per tile
    if n_tiles > 1:
        tg = _round_up(tg, 8)                     # sublane-aligned output blocks
    while (tg * K) % 8 != 0:                      # sublane-aligned row tiles
        tg += 1
    g_pad = _round_up(G, tg)
    return tg, g_pad


# ----------------------------------------------------------------------------
# Streaming (row-tiled) path
# ----------------------------------------------------------------------------
def _layer_kernel(x_ref, w_ref, aff_ref, z_ref, stats_ref, *, pre_activation):
    """One MLP layer over a row tile:
         h = relu(prev_scale * x + prev_shift)   (fused BN+ReLU of prev layer)
         z = h @ W                               (bf16 MXU operands, f32 accum)
         stats[tile] = [sum(z), sum(z^2)]        (per-tile partials, one store)
    """
    h = x_ref[...]                                               # bf16 [T, c_in]
    if pre_activation:
        aff = aff_ref[...]                                       # f32 [2, c_in]
        hf = jnp.maximum(h.astype(jnp.float32) * aff[0:1, :] + aff[1:2, :], 0.0)
        h = hf.astype(jnp.bfloat16)
    z = jnp.dot(h, w_ref[...], preferred_element_type=jnp.float32)  # f32 [T, c_out]

    stats = jnp.concatenate(
        [jnp.sum(z, axis=0, keepdims=True),
         jnp.sum(z * z, axis=0, keepdims=True)], axis=0)         # [2, c_out]
    stats_ref[...] = stats[None, :, :]                           # single store
    z_ref[...] = z.astype(z_ref.dtype)


def _layer_pass(a, w_bf16, affine, *, tile_rows, pre_activation, vmem_limit):
    p_pad, c_in = a.shape
    c_out = w_bf16.shape[1]
    n_tiles = p_pad // tile_rows
    if affine is None:
        affine = jnp.zeros((2, c_in), jnp.float32)               # dummy, unread

    kernel = functools.partial(_layer_kernel, pre_activation=pre_activation)

    z, part = pl.pallas_call(
        kernel,
        grid=(n_tiles,),
        in_specs=[
            pl.BlockSpec((tile_rows, c_in), lambda i: (i, 0)),   # activation tile
            pl.BlockSpec((c_in, c_out), lambda i: (0, 0)),       # resident weights
            pl.BlockSpec((2, c_in), lambda i: (0, 0)),           # resident affine
        ],
        out_specs=[
            pl.BlockSpec((tile_rows, c_out), lambda i: (i, 0)),  # pre-BN activation
            pl.BlockSpec((1, 2, c_out), lambda i: (i, 0, 0)),    # per-tile stats
        ],
        out_shape=[
            jax.ShapeDtypeStruct((p_pad, c_out), jnp.bfloat16),
            jax.ShapeDtypeStruct((n_tiles, 2, c_out), jnp.float32),
        ],
        compiler_params=pltpu.CompilerParams(
            dimension_semantics=("parallel",),                   # no serial dep
            vmem_limit_bytes=vmem_limit),
    )(a, w_bf16, affine)
    return z, part


def _final_max_kernel(z_ref, aff_ref, out_ref):
    """Final normalize + ReLU + max over the K samples of each group."""
    z = z_ref[...].astype(jnp.float32)                           # [TG, K, C]
    aff = aff_ref[...]                                           # [2, C]
    h = jnp.maximum(z * aff[0:1, :] + aff[1:2, :], 0.0)
    out_ref[...] = jnp.max(h, axis=1)                            # [TG, C]


def _final_max_pass(z, affine, *, g_pad, k, tg, vmem_limit):
    c = z.shape[1]
    z3 = z.reshape(g_pad, k, c)                                  # layout-free reshape
    n_tiles = g_pad // tg
    return pl.pallas_call(
        _final_max_kernel,
        grid=(n_tiles,),
        in_specs=[
            pl.BlockSpec((tg, k, c), lambda i: (i, 0, 0)),
            pl.BlockSpec((2, c), lambda i: (0, 0)),
        ],
        out_specs=pl.BlockSpec((tg, c), lambda i: (i, 0)),
        out_shape=jax.ShapeDtypeStruct((g_pad, c), jnp.float32),
        compiler_params=pltpu.CompilerParams(
            dimension_semantics=("parallel",),
            vmem_limit_bytes=vmem_limit),
    )(z3, affine)


# ----------------------------------------------------------------------------
# Fully VMEM-resident fast path (whole MLP + BN + ReLU + K-max in one call)
# ----------------------------------------------------------------------------
def _resident_kernel(*refs, num_layers, G, K, inv_p):
    x_ref, out_ref = refs[0], refs[-1]
    a = x_ref[...]                                               # bf16 [P, c0]
    for l in range(num_layers):
        w = refs[1 + 2 * l][...]                                 # bf16 [c_in, c_out]
        gb = refs[2 + 2 * l][...]                                # f32  [2, c_out]
        z = jnp.dot(a, w, preferred_element_type=jnp.float32)    # f32  [P, c_out]
        mean = jnp.sum(z, axis=0, keepdims=True) * inv_p
        var = jnp.maximum(
            jnp.sum(z * z, axis=0, keepdims=True) * inv_p - mean * mean, 0.0)
        scale = gb[0:1, :] * jax.lax.rsqrt(var + _BN_EPS)
        shift = gb[1:2, :] - mean * scale
        h = jnp.maximum(z * scale + shift, 0.0)
        if l < num_layers - 1:
            a = h.astype(jnp.bfloat16)
        else:
            out_ref[...] = jnp.max(h.reshape(G, K, h.shape[-1]), axis=1)


def _resident_fits(p, dims, vmem_limit):
    c_pair_max = max(dims[i] + dims[i + 1] for i in range(len(dims) - 1))
    # f32 producer/consumer activation pair (x2 headroom for compiler temps),
    # plus the bf16 input copy and the f32 output (conservative).
    est = p * c_pair_max * 4 * 2 + p * dims[0] * 2 + p * dims[-1] * 4
    return est <= int(vmem_limit * 0.6)


def _resident_mlp(x_bf16, params, *, G, K, p_true, vmem_limit):
    c_last = params[-1][0].shape[1]
    flat = [x_bf16]
    for (W, gamma, beta) in params:
        flat.append(W.astype(jnp.bfloat16))
        flat.append(jnp.stack([gamma, beta], axis=0).astype(jnp.float32))
    kernel = functools.partial(_resident_kernel, num_layers=len(params),
                               G=G, K=K, inv_p=1.0 / float(p_true))
    return pl.pallas_call(
        kernel,
        out_shape=jax.ShapeDtypeStruct((G, c_last), jnp.float32),
        compiler_params=pltpu.CompilerParams(vmem_limit_bytes=vmem_limit),
    )(*flat)


# ----------------------------------------------------------------------------
# MLP + BN(train) + ReLU + per-group K-max
# ----------------------------------------------------------------------------
def mlp_bn_relu_max(x_flat, params, K, *, force_streaming=False,
                    max_tile_rows=None):
    """x_flat: [P, 8] f32 with P = B*S*K.  Returns [P // K, C_last] f32."""
    p_true, c0 = x_flat.shape
    G = p_true // K
    num_layers = len(params)
    dims = [c0] + [p[0].shape[1] for p in params]
    vmem_limit = _get_vmem_limit()

    x_bf16 = x_flat.astype(jnp.bfloat16)           # halves the layer-0 HBM read

    if (not force_streaming) and _resident_fits(p_true, dims, vmem_limit):
        return _resident_mlp(x_bf16, params, G=G, K=K, p_true=p_true,
                             vmem_limit=vmem_limit)

    # ---- streaming path ----
    c_pair_max = max(dims[i] + dims[i + 1] for i in range(num_layers))
    target_rows = _pick_tile_rows(vmem_limit, c_pair_max)
    if max_tile_rows is not None:
        target_rows = min(target_rows, int(max_tile_rows))
    tg, g_pad = _pick_group_tile(G, K, target_rows)
    tile_rows = tg * K
    p_pad = g_pad * K
    n_pad = p_pad - p_true
    if n_pad:
        x_bf16 = jnp.pad(x_bf16, ((0, n_pad), (0, 0)))

    a = x_bf16
    affine = None
    pad_vec = jnp.zeros((c0,), jnp.bfloat16)        # value of a padded row of `a`
    for l, (W, gamma, beta) in enumerate(params):
        W_bf16 = W.astype(jnp.bfloat16)
        z, part = _layer_pass(a, W_bf16, affine, tile_rows=tile_rows,
                              pre_activation=(l > 0), vmem_limit=vmem_limit)
        stats = jnp.sum(part, axis=0)               # [2, c_out]

        if n_pad:
            # Padded rows are all identical -> remove their contribution
            # analytically instead of masking inside the kernel.
            if l == 0:
                z_pad = jnp.zeros((dims[1],), jnp.float32)   # zero input rows
            else:
                h_pad = jnp.maximum(
                    pad_vec.astype(jnp.float32) * affine[0] + affine[1], 0.0)
                z_pad = jnp.dot(h_pad.astype(jnp.bfloat16), W_bf16,
                                preferred_element_type=jnp.float32)
                stats = stats - float(n_pad) * jnp.stack([z_pad, z_pad * z_pad], 0)
            pad_vec = z_pad.astype(jnp.bfloat16)

        # Training-mode BatchNorm2d: biased batch stats over all P_true points,
        # single-pass variance (E[z^2]-mean^2, f32 accumulation).  The conv
        # bias is dropped; BN's mean subtraction cancels it exactly.
        mean = stats[0] / float(p_true)
        var = jnp.maximum(stats[1] / float(p_true) - mean * mean, 0.0)
        scale = gamma * jax.lax.rsqrt(var + _BN_EPS)
        shift = beta - mean * scale
        affine = jnp.stack([scale, shift], axis=0).astype(jnp.float32)
        a = z

    out = _final_max_pass(a, affine, g_pad=g_pad, k=K, tg=tg,
                          vmem_limit=vmem_limit)                 # [G_pad, C_last]
    return out[:G]


# ----------------------------------------------------------------------------
# Module wrapper
# ----------------------------------------------------------------------------
@functools.partial(jax.jit, static_argnames=("force_streaming", "max_tile_rows"))
def _forward(params, xyz, centers, center_norms, idx, pts, norm_ori,
             force_streaming=False, max_tile_rows=None):
    ri_feat, _idx_ordered = ri_features(xyz, centers, center_norms, idx,
                                        pts, norm_ori)                   # [B,S,K,8]
    B, S, K, C = ri_feat.shape
    x_flat = ri_feat.reshape(B * S * K, C)
    out = mlp_bn_relu_max(x_flat, params, K, force_streaming=force_streaming,
                          max_tile_rows=max_tile_rows)                   # [B*S, C_last]
    return out.reshape(B, S, -1)                                         # == permute(0,2,1)


class RIConv2SetAbstractionPallas:
    def __init__(self, npoint, radius, nsample, in_channel, mlp, group_all,
                 encoder_channel, *, key):
        self.npoint = npoint
        self.radius = radius
        self.nsample = nsample
        self.group_all = group_all
        self.encoder_channel = encoder_channel

        mlp_0 = [64, 128]                      # prev_mlp_convs (fixed in reference)
        dims = [8] + mlp_0 + list(mlp)         # 8 -> 64 -> 128 -> mlp...
        self.params = []
        keys = jax.random.split(key, len(dims) - 1)
        for i in range(len(dims) - 1):
            cin, cout = dims[i], dims[i + 1]
            W = jax.random.normal(keys[i], (cin, cout), jnp.float32) / jnp.sqrt(float(cin))
            gamma = jnp.ones((cout,), jnp.float32)     # BatchNorm2d default init
            beta = jnp.zeros((cout,), jnp.float32)
            # Conv2d bias intentionally omitted: training-mode BN subtracts the
            # batch mean, which cancels the bias exactly.
            self.params.append((W, gamma, beta))

    def __call__(self, xyz, centers, norm, center_norms, idx, pts, norm_ori,
                 *, force_streaming=False, max_tile_rows=None):
        # xyz: [B,M,K,3] (local grouped coords), centers: [B,M,3], norm: [B,M,K,3]
        # center_norms: [B,M,3], idx: [B,M,K], pts: [B,N,3], norm_ori: [B,N,3]
        # (`norm` is unused by the reference forward as well.)
        return _forward(self.params, xyz, centers, center_norms, idx, pts,
                        norm_ori, force_streaming=force_streaming,
                        max_tile_rows=max_tile_rows)


# ----------------------------------------------------------------------------
# Demo
# ----------------------------------------------------------------------------
def _make_inputs(key, B, S, K, N):
    k_pts, k_nrm, k_idx, k_ctr, k_cnm = jax.random.split(key, 5)
    pts = jax.random.normal(k_pts, (B, N, 3), jnp.float32)
    norm_ori = jax.random.normal(k_nrm, (B, N, 3), jnp.float32)
    norm_ori = norm_ori / jnp.linalg.norm(norm_ori, axis=-1, keepdims=True)
    idx = jax.random.randint(k_idx, (B, S, K), 0, N, jnp.int32)
    centers = jax.random.normal(k_ctr, (B, S, 3), jnp.float32)
    center_norms = jax.random.normal(k_cnm, (B, S, 3), jnp.float32)
    center_norms = center_norms / jnp.linalg.norm(center_norms, axis=-1, keepdims=True)
    xyz = index_points(pts, idx) - centers[:, :, None, :]        # grouped local coords
    norm = index_points(norm_ori, idx)                           # unused by forward
    return xyz, centers, norm, center_norms, idx, pts, norm_ori


if __name__ == "__main__":
    key = jax.random.PRNGKey(0)
    k_model1, k_in1, k_model2, k_in2 = jax.random.split(key, 4)

    mlp = [32]
    B, S, K, N = 2, 8, 16, 32

    # --- Config 1: small shapes -> auto path (fully VMEM-resident fused MLP).
    inputs1 = _make_inputs(k_in1, B, S, K, N)
    model1 = RIConv2SetAbstractionPallas(
        npoint=S, radius=0.2, nsample=K, in_channel=3, mlp=mlp,
        group_all=False, encoder_channel=64, key=k_model1)
    out_res = jax.block_until_ready(model1(*inputs1))
    assert out_res.shape == (B, S, mlp[-1]), out_res.shape
    assert bool(jnp.all(jnp.isfinite(out_res)))

    # --- Same inputs through the streaming (row-tiled) path; loose cross-check
    #     (paths differ only in bf16 rounding placement).
    out_str = jax.block_until_ready(model1(*inputs1, force_streaming=True))
    assert out_str.shape == out_res.shape
    assert bool(jnp.all(jnp.isfinite(out_str)))
    assert float(jnp.max(jnp.abs(out_str - out_res))) < 0.5

    # --- Config 2: G=18 groups with a tiny forced tile -> multi-tile grid and
    #     the analytic padded-row stats correction are both exercised.
    B2, S2 = 2, 9
    inputs2 = _make_inputs(k_in2, B2, S2, K, N)
    model2 = RIConv2SetAbstractionPallas(
        npoint=S2, radius=0.2, nsample=K, in_channel=3, mlp=mlp,
        group_all=False, encoder_channel=64, key=k_model2)
    out2_str = jax.block_until_ready(
        model2(*inputs2, force_streaming=True, max_tile_rows=64))
    out2_res = jax.block_until_ready(model2(*inputs2))
    assert out2_str.shape == (B2, S2, mlp[-1]), out2_str.shape
    assert bool(jnp.all(jnp.isfinite(out2_str)))
    assert float(jnp.max(jnp.abs(out2_str - out2_res))) < 0.5

    print("KERNEL_OK")
</pallas_src>

<mosaic_0001>
module attributes {stable_mosaic.version = 11 : i64} {
  func.func @_resident_kernel(%arg0: memref<256x8xbf16, #tpu.memory_space<vmem>>, %arg1: memref<8x64xbf16, #tpu.memory_space<vmem>>, %arg2: memref<2x64xf32, #tpu.memory_space<vmem>>, %arg3: memref<64x128xbf16, #tpu.memory_space<vmem>>, %arg4: memref<2x128xf32, #tpu.memory_space<vmem>>, %arg5: memref<128x32xbf16, #tpu.memory_space<vmem>>, %arg6: memref<2x32xf32, #tpu.memory_space<vmem>>, %arg7: memref<16x32xf32, #tpu.memory_space<vmem>>) attributes {dimension_semantics = [], scalar_prefetch = 0 : i64, scratch_operands = 0 : i64, tpu.core_type = #tpu.core_type<tc>} {
    %c0 = arith.constant 0 : index
    %c0_0 = arith.constant 0 : index
    %0 = vector.load %arg0[%c0, %c0_0] : memref<256x8xbf16, #tpu.memory_space<vmem>>, vector<256x8xbf16>
    %c0_1 = arith.constant 0 : index
    %c0_2 = arith.constant 0 : index
    %1 = vector.load %arg1[%c0_1, %c0_2] : memref<8x64xbf16, #tpu.memory_space<vmem>>, vector<8x64xbf16>
    %c0_3 = arith.constant 0 : index
    %c0_4 = arith.constant 0 : index
    %2 = vector.load %arg2[%c0_3, %c0_4] : memref<2x64xf32, #tpu.memory_space<vmem>>, vector<2x64xf32>
    %cst = arith.constant dense<0.000000e+00> : vector<256x64xf32>
    %3 = tpu.matmul %0, %1, %cst {dimension_numbers = #tpu.dot_dimension_numbers<[1], [0], [0], [1], [0, 0, 1, 1], [], []>} : vector<256x8xbf16>, vector<8x64xbf16>, vector<256x64xf32> -> vector<256x64xf32>
    %cst_5 = arith.constant dense<0.000000e+00> : vector<64xf32>
    %4 = vector.multi_reduction <add>, %3, %cst_5 [0] : vector<256x64xf32> to vector<64xf32>
    %5 = vector.shape_cast %4 : vector<64xf32> to vector<1x64xf32>
    %cst_6 = arith.constant 3.906250e-03 : f32
    %6 = vector.broadcast %cst_6 : f32 to vector<1x64xf32>
    %7 = arith.mulf %5, %6 : vector<1x64xf32>
    %8 = arith.mulf %3, %3 : vector<256x64xf32>
    %cst_7 = arith.constant dense<0.000000e+00> : vector<64xf32>
    %9 = vector.multi_reduction <add>, %8, %cst_7 [0] : vector<256x64xf32> to vector<64xf32>
    %10 = vector.shape_cast %9 : vector<64xf32> to vector<1x64xf32>
    %cst_8 = arith.constant 3.906250e-03 : f32
    %11 = vector.broadcast %cst_8 : f32 to vector<1x64xf32>
    %12 = arith.mulf %10, %11 : vector<1x64xf32>
    %13 = arith.mulf %7, %7 : vector<1x64xf32>
    %14 = arith.subf %12, %13 : vector<1x64xf32>
    %cst_9 = arith.constant 0.000000e+00 : f32
    %15 = vector.broadcast %cst_9 : f32 to vector<1x64xf32>
    %16 = arith.maximumf %14, %15 : vector<1x64xf32>
    %17 = vector.extract_strided_slice %2 {offsets = [0, 0], sizes = [1, 64], strides = [1, 1]} : vector<2x64xf32> to vector<1x64xf32>
    %cst_10 = arith.constant 9.99999974E-6 : f32
    %18 = vector.broadcast %cst_10 : f32 to vector<1x64xf32>
    %19 = arith.addf %16, %18 : vector<1x64xf32>
    %20 = math.rsqrt %19 : vector<1x64xf32>
    %21 = arith.mulf %17, %20 : vector<1x64xf32>
    %22 = vector.extract_strided_slice %2 {offsets = [1, 0], sizes = [1, 64], strides = [1, 1]} : vector<2x64xf32> to vector<1x64xf32>
    %23 = arith.mulf %7, %21 : vector<1x64xf32>
    %24 = arith.subf %22, %23 : vector<1x64xf32>
    %25 = vector.broadcast %21 : vector<1x64xf32> to vector<256x64xf32>
    %26 = arith.mulf %3, %25 : vector<256x64xf32>
    %27 = vector.broadcast %24 : vector<1x64xf32> to vector<256x64xf32>
    %28 = arith.addf %26, %27 : vector<256x64xf32>
    %cst_11 = arith.constant 0.000000e+00 : f32
    %29 = vector.broadcast %cst_11 : f32 to vector<256x64xf32>
    %30 = arith.maximumf %28, %29 : vector<256x64xf32>
    %31 = arith.truncf %30 : vector<256x64xf32> to vector<256x64xbf16>
    %c0_12 = arith.constant 0 : index
    %c0_13 = arith.constant 0 : index
    %32 = vector.load %arg3[%c0_12, %c0_13] : memref<64x128xbf16, #tpu.memory_space<vmem>>, vector<64x128xbf16>
    %c0_14 = arith.constant 0 : index
    %c0_15 = arith.constant 0 : index
    %33 = vector.load %arg4[%c0_14, %c0_15] : memref<2x128xf32, #tpu.memory_space<vmem>>, vector<2x128xf32>
    %cst_16 = arith.constant dense<0.000000e+00> : vector<256x128xf32>
    %34 = tpu.matmul %31, %32, %cst_16 {dimension_numbers = #tpu.dot_dimension_numbers<[1], [0], [0], [1], [0, 0, 1, 1], [], []>} : vector<256x64xbf16>, vector<64x128xbf16>, vector<256x128xf32> -> vector<256x128xf32>
    %cst_17 = arith.constant dense<0.000000e+00> : vector<128xf32>
    %35 = vector.multi_reduction <add>, %34, %cst_17 [0] : vector<256x128xf32> to vector<128xf32>
    %36 = vector.shape_cast %35 : vector<128xf32> to vector<1x128xf32>
    %cst_18 = arith.constant 3.906250e-03 : f32
    %37 = vector.broadcast %cst_18 : f32 to vector<1x128xf32>
    %38 = arith.mulf %36, %37 : vector<1x128xf32>
    %39 = arith.mulf %34, %34 : vector<256x128xf32>
    %cst_19 = arith.constant dense<0.000000e+00> : vector<128xf32>
    %40 = vector.multi_reduction <add>, %39, %cst_19 [0] : vector<256x128xf32> to vector<128xf32>
    %41 = vector.shape_cast %40 : vector<128xf32> to vector<1x128xf32>
    %cst_20 = arith.constant 3.906250e-03 : f32
    %42 = vector.broadcast %cst_20 : f32 to vector<1x128xf32>
    %43 = arith.mulf %41, %42 : vector<1x128xf32>
    %44 = arith.mulf %38, %38 : vector<1x128xf32>
    %45 = arith.subf %43, %44 : vector<1x128xf32>
    %cst_21 = arith.constant 0.000000e+00 : f32
    %46 = vector.broadcast %cst_21 : f32 to vector<1x128xf32>
    %47 = arith.maximumf %45, %46 : vector<1x128xf32>
    %48 = vector.extract_strided_slice %33 {offsets = [0, 0], sizes = [1, 128], strides = [1, 1]} : vector<2x128xf32> to vector<1x128xf32>
    %cst_22 = arith.constant 9.99999974E-6 : f32
    %49 = vector.broadcast %cst_22 : f32 to vector<1x128xf32>
    %50 = arith.addf %47, %49 : vector<1x128xf32>
    %51 = math.rsqrt %50 : vector<1x128xf32>
    %52 = arith.mulf %48, %51 : vector<1x128xf32>
    %53 = vector.extract_strided_slice %33 {offsets = [1, 0], sizes = [1, 128], strides = [1, 1]} : vector<2x128xf32> to vector<1x128xf32>
    %54 = arith.mulf %38, %52 : vector<1x128xf32>
    %55 = arith.subf %53, %54 : vector<1x128xf32>
    %56 = vector.broadcast %52 : vector<1x128xf32> to vector<256x128xf32>
    %57 = arith.mulf %34, %56 : vector<256x128xf32>
    %58 = vector.broadcast %55 : vector<1x128xf32> to vector<256x128xf32>
    %59 = arith.addf %57, %58 : vector<256x128xf32>
    %cst_23 = arith.constant 0.000000e+00 : f32
    %60 = vector.broadcast %cst_23 : f32 to vector<256x128xf32>
    %61 = arith.maximumf %59, %60 : vector<256x128xf32>
    %62 = arith.truncf %61 : vector<256x128xf32> to vector<256x128xbf16>
    %c0_24 = arith.constant 0 : index
    %c0_25 = arith.constant 0 : index
    %63 = vector.load %arg5[%c0_24, %c0_25] : memref<128x32xbf16, #tpu.memory_space<vmem>>, vector<128x32xbf16>
    %c0_26 = arith.constant 0 : index
    %c0_27 = arith.constant 0 : index
    %64 = vector.load %arg6[%c0_26, %c0_27] : memref<2x32xf32, #tpu.memory_space<vmem>>, vector<2x32xf32>
    %cst_28 = arith.constant dense<0.000000e+00> : vector<256x32xf32>
    %65 = tpu.matmul %62, %63, %cst_28 {dimension_numbers = #tpu.dot_dimension_numbers<[1], [0], [0], [1], [0, 0, 1, 1], [], []>} : vector<256x128xbf16>, vector<128x32xbf16>, vector<256x32xf32> -> vector<256x32xf32>
    %cst_29 = arith.constant dense<0.000000e+00> : vector<32xf32>
    %66 = vector.multi_reduction <add>, %65, %cst_29 [0] : vector<256x32xf32> to vector<32xf32>
    %67 = vector.shape_cast %66 : vector<32xf32> to vector<1x32xf32>
    %cst_30 = arith.constant 3.906250e-03 : f32
    %68 = vector.broadcast %cst_30 : f32 to vector<1x32xf32>
    %69 = arith.mulf %67, %68 : vector<1x32xf32>
    %70 = arith.mulf %65, %65 : vector<256x32xf32>
    %cst_31 = arith.constant dense<0.000000e+00> : vector<32xf32>
    %71 = vector.multi_reduction <add>, %70, %cst_31 [0] : vector<256x32xf32> to vector<32xf32>
    %72 = vector.shape_cast %71 : vector<32xf32> to vector<1x32xf32>
    %cst_32 = arith.constant 3.906250e-03 : f32
    %73 = vector.broadcast %cst_32 : f32 to vector<1x32xf32>
    %74 = arith.mulf %72, %73 : vector<1x32xf32>
    %75 = arith.mulf %69, %69 : vector<1x32xf32>
    %76 = arith.subf %74, %75 : vector<1x32xf32>
    %cst_33 = arith.constant 0.000000e+00 : f32
    %77 = vector.broadcast %cst_33 : f32 to vector<1x32xf32>
    %78 = arith.maximumf %76, %77 : vector<1x32xf32>
    %79 = vector.extract_strided_slice %64 {offsets = [0, 0], sizes = [1, 32], strides = [1, 1]} : vector<2x32xf32> to vector<1x32xf32>
    %cst_34 = arith.constant 9.99999974E-6 : f32
    %80 = vector.broadcast %cst_34 : f32 to vector<1x32xf32>
    %81 = arith.addf %78, %80 : vector<1x32xf32>
    %82 = math.rsqrt %81 : vector<1x32xf32>
    %83 = arith.mulf %79, %82 : vector<1x32xf32>
    %84 = vector.extract_strided_slice %64 {offsets = [1, 0], sizes = [1, 32], strides = [1, 1]} : vector<2x32xf32> to vector<1x32xf32>
    %85 = arith.mulf %69, %83 : vector<1x32xf32>
    %86 = arith.subf %84, %85 : vector<1x32xf32>
    %87 = vector.broadcast %83 : vector<1x32xf32> to vector<256x32xf32>
    %88 = arith.mulf %65, %87 : vector<256x32xf32>
    %89 = vector.broadcast %86 : vector<1x32xf32> to vector<256x32xf32>
    %90 = arith.addf %88, %89 : vector<256x32xf32>
    %cst_35 = arith.constant 0.000000e+00 : f32
    %91 = vector.broadcast %cst_35 : f32 to vector<256x32xf32>
    %92 = arith.maximumf %90, %91 : vector<256x32xf32>
    %93 = vector.shape_cast %92 : vector<256x32xf32> to vector<16x16x32xf32>
    %cst_36 = arith.constant dense<0xFF800000> : vector<16x32xf32>
    %94 = vector.multi_reduction <maximumf>, %93, %cst_36 [1] : vector<16x16x32xf32> to vector<16x32xf32>
    %c0_37 = arith.constant 0 : index
    %c0_38 = arith.constant 0 : index
    %95 = vector.load %arg7[%c0_37, %c0_38] : memref<16x32xf32, #tpu.memory_space<vmem>>, vector<16x32xf32>
    tpu.vector_store %arg7[%c0_37, %c0_38], %94 {strides = array<i32>} : memref<16x32xf32, #tpu.memory_space<vmem>>, vector<16x32xf32>,
    return
  }
}

</mosaic_0001>

<llo_original>
// kernel: _forward.1
$region0: #{_forward.1}
  #allocation0 [shape = 'u32[]', space=smem, size = 0x4, offset = 0x4, fixed_abs, tag = 'smem constant byte address 0x4 - core index']
  #allocation1 [shape = 'u32[144,128]{1,0:T(1,128)}', space=vmem, size = 0x12000, scoped, tag = 'internal scratch']
  %s0 = inlined_call_operand.vmem [shape: bf16[256,8], index: 0, kind: input, shape index: {}]
  %s1 = inlined_call_operand.vmem [shape: bf16[8,64], index: 1, kind: input, shape index: {}]
  %s2 = inlined_call_operand.vmem [shape: f32[2,64], index: 2, kind: input, shape index: {}]
  %s3 = inlined_call_operand.vmem [shape: bf16[64,128], index: 3, kind: input, shape index: {}]
  %s4 = inlined_call_operand.vmem [shape: f32[2,128], index: 4, kind: input, shape index: {}]
  %s5 = inlined_call_operand.vmem [shape: bf16[128,32], index: 5, kind: input, shape index: {}]
  %s6 = inlined_call_operand.vmem [shape: f32[2,32], index: 6, kind: input, shape index: {}]
  %s7 = inlined_call_operand.hbm [shape: f32[16,32], index: 7, kind: output, shape index: {}]
  %s8 = sld [smem:[#allocation0]]
  $region38: #{_forward.1} parent=0
    _
  %s10 = ssub.s32 1, %s8
  %s11 = scalar_select 0, %s10, %s8
  $region1: #{_forward.1} parent=0
    #allocation2 [shape = 'u8[8192]{0}', space=vmem, size = 0x2000, scoped, tag = 'output window, operand 0, single buffered']
    #allocation3 [shape = 's32[1]{0}', space=sflag, size = 0x4, scoped, tag = 'scoped memory for _forward.1']
    %12 = vsyncpa [#allocation3], 0
    // Predicated region
    $region2: #{_forward.1} parent=1 // pred_check
      _
    $region3: #{_forward.1} parent=1 // pred_check_branch
      %14 = sbr.rel (0) target = $region5
    $region4: #{_forward.1} parent=1 // pred_region
      _
    $region5: #{_forward.1} parent=1 // pred_fallthru
      _
    // Predicated region
    $region6: #{_forward.1} parent=1 // pred_check
      _
    $region7: #{_forward.1} parent=1 // pred_check_branch
      %16 = sbr.rel (0) target = $region9
    $region8: #{_forward.1} parent=1 // pred_region
      _
    $region9: #{_forward.1} parent=1 // pred_fallthru
      _
    // Predicated region
    $region10: #{_forward.1} parent=1 // pred_check
      _
    $region11: #{_forward.1} parent=1 // pred_check_branch
      %18 = sbr.rel (0) target = $region13
    $region12: #{_forward.1} parent=1 // pred_region
      _
    $region13: #{_forward.1} parent=1 // pred_fallthru
      _
    // Predicated region
    $region14: #{_forward.1} parent=1 // pred_check
      _
    $region15: #{_forward.1} parent=1 // pred_check_branch
      %20 = sbr.rel (0) target = $region17
    $region16: #{_forward.1} parent=1 // pred_region
      _
    $region17: #{_forward.1} parent=1 // pred_fallthru
      _
    // Predicated region
    $region18: #{_forward.1} parent=1 // pred_check
      _
    $region19: #{_forward.1} parent=1 // pred_check_branch
      %22 = sbr.rel (0) target = $region21
    $region20: #{_forward.1} parent=1 // pred_region
      _
    $region21: #{_forward.1} parent=1 // pred_fallthru
      _
    // Predicated region
    $region22: #{_forward.1} parent=1 // pred_check
      _
    $region23: #{_forward.1} parent=1 // pred_check_branch
      %24 = sbr.rel (0) target = $region25
    $region24: #{_forward.1} parent=1 // pred_region
      _
    $region25: #{_forward.1} parent=1 // pred_fallthru
      _
    // Predicated region
    $region26: #{_forward.1} parent=1 // pred_check
      _
    $region27: #{_forward.1} parent=1 // pred_check_branch
      %26 = sbr.rel (0) target = $region29
    $region28: #{_forward.1} parent=1 // pred_region
      _
    $region29: #{_forward.1} parent=1 // pred_fallthru
      _
    %v28 = vld [vmem:[%s0] sm:$0xf]
    %v29 = vld [vmem:[%s0 + $0x4] sm:$0xf]
    %v30 = vld [vmem:[%s0 + $0x8] sm:$0xf]
    %v31 = vld [vmem:[%s0 + $0xc] sm:$0xf]
    %v32 = vld [vmem:[%s0 + $0x10] sm:$0xf]
    %v33 = vld [vmem:[%s0 + $0x14] sm:$0xf]
    %v34 = vld [vmem:[%s0 + $0x18] sm:$0xf]
    %v35 = vld [vmem:[%s0 + $0x1c] sm:$0xf]
    %v36 = vld [vmem:[%s0 + $0x20] sm:$0xf]
    %v37 = vld [vmem:[%s0 + $0x24] sm:$0xf]
    %v38 = vld [vmem:[%s0 + $0x28] sm:$0xf]
    %v39 = vld [vmem:[%s0 + $0x2c] sm:$0xf]
    %v40 = vld [vmem:[%s0 + $0x30] sm:$0xf]
    %v41 = vld [vmem:[%s0 + $0x34] sm:$0xf]
    %v42 = vld [vmem:[%s0 + $0x38] sm:$0xf]
    %v43 = vld [vmem:[%s0 + $0x3c] sm:$0xf]
    %v44 = vld [vmem:[%s0 + $0x40] sm:$0xf]
    %v45 = vld [vmem:[%s0 + $0x44] sm:$0xf]
    %v46 = vld [vmem:[%s0 + $0x48] sm:$0xf]
    %v47 = vld [vmem:[%s0 + $0x4c] sm:$0xf]
    %v48 = vld [vmem:[%s0 + $0x50] sm:$0xf]
    %v49 = vld [vmem:[%s0 + $0x54] sm:$0xf]
    %v50 = vld [vmem:[%s0 + $0x58] sm:$0xf]
    %v51 = vld [vmem:[%s0 + $0x5c] sm:$0xf]
    %v52 = vld [vmem:[%s0 + $0x60] sm:$0xf]
    %v53 = vld [vmem:[%s0 + $0x64] sm:$0xf]
    %v54 = vld [vmem:[%s0 + $0x68] sm:$0xf]
    %v55 = vld [vmem:[%s0 + $0x6c] sm:$0xf]
    %v56 = vld [vmem:[%s0 + $0x70] sm:$0xf]
    %v57 = vld [vmem:[%s0 + $0x74] sm:$0xf]
    %v58 = vld [vmem:[%s0 + $0x78] sm:$0xf]
    %v59 = vld [vmem:[%s0 + $0x7c] sm:$0xf]
    %v60 = vld [vmem:[%s1] sm:$0xf]
    %v61 = vld [vmem:[%s2] sm:$0x3]
    %v94 = vunpack.c.l.b16 %v28
    %v95 = vunpack.c.l.b16 %v29
    %v96 = vunpack.c.l.b16 %v30
    %v97 = vunpack.c.l.b16 %v31
    %v98 = vunpack.c.l.b16 %v32
    %v99 = vunpack.c.l.b16 %v33
    %v100 = vunpack.c.l.b16 %v34
    %v101 = vunpack.c.l.b16 %v35
    %v102 = vunpack.c.l.b16 %v36
    %v103 = vunpack.c.l.b16 %v37
    %v104 = vunpack.c.l.b16 %v38
    %v105 = vunpack.c.l.b16 %v39
    %v106 = vunpack.c.l.b16 %v40
    %v107 = vunpack.c.l.b16 %v41
    %v108 = vunpack.c.l.b16 %v42
    %v109 = vunpack.c.l.b16 %v43
    %v110 = vunpack.c.l.b16 %v44
    %v111 = vunpack.c.l.b16 %v45
    %v112 = vunpack.c.l.b16 %v46
    %v113 = vunpack.c.l.b16 %v47
    %v114 = vunpack.c.l.b16 %v48
    %v115 = vunpack.c.l.b16 %v49
    %v116 = vunpack.c.l.b16 %v50
    %v117 = vunpack.c.l.b16 %v51
    %v118 = vunpack.c.l.b16 %v52
    %v119 = vunpack.c.l.b16 %v53
    %v120 = vunpack.c.l.b16 %v54
    %v121 = vunpack.c.l.b16 %v55
    %v122 = vunpack.c.l.b16 %v56
    %v123 = vunpack.c.l.b16 %v57
    %v124 = vunpack.c.l.b16 %v58
    %v125 = vunpack.c.l.b16 %v59
    %v126 = vpack.c.b16 %v95, %v94
    %v127 = vpack.c.b16 %v97, %v96
    %v128 = vpack.c.b16 %v99, %v98
    %v129 = vpack.c.b16 %v101, %v100
    %v130 = vpack.c.b16 %v103, %v102
    %v131 = vpack.c.b16 %v105, %v104
    %v132 = vpack.c.b16 %v107, %v106
    %v133 = vpack.c.b16 %v109, %v108
    %v134 = vpack.c.b16 %v111, %v110
    %v135 = vpack.c.b16 %v113, %v112
    %v136 = vpack.c.b16 %v115, %v114
    %v137 = vpack.c.b16 %v117, %v116
    %v138 = vpack.c.b16 %v119, %v118
    %v139 = vpack.c.b16 %v121, %v120
    %v140 = vpack.c.b16 %v123, %v122
    %v141 = vpack.c.b16 %v125, %v124
    %vm142 = vcmask 64512
    %v144 = vsel %vm142, %v126, 0
    %v147 = vsel %vm142, %v127, 0
    %v150 = vsel %vm142, %v128, 0
    %v153 = vsel %vm142, %v129, 0
    %v156 = vsel %vm142, %v130, 0
    %v159 = vsel %vm142, %v131, 0
    %v162 = vsel %vm142, %v132, 0
    %v165 = vsel %vm142, %v133, 0
    %v168 = vsel %vm142, %v134, 0
    %v171 = vsel %vm142, %v135, 0
    %v174 = vsel %vm142, %v136, 0
    %v177 = vsel %vm142, %v137, 0
    %v180 = vsel %vm142, %v138, 0
    %v183 = vsel %vm142, %v139, 0
    %v186 = vsel %vm142, %v140, 0
    %v189 = vsel %vm142, %v141, 0
    %vm191 = vcmask 1043456
    %v193 = vsel %vm191, %v60, 0
    %195 = vmatprep.subr.bf16.mxu0 0
    %196 = vmatpush1.bf16.msra.mxu0 0
    %197 = vmatprep.subr.bf16.mxu0 0
    %198 = vmatpush1.bf16.msra.mxu0 0
    %199 = vmatprep.subr.bf16.mxu0 0
    %200 = vmatpush1.bf16.msra.mxu0 0
    %201 = vmatprep.subr.bf16.mxu0 0
    %202 = vmatpush1.bf16.msra.mxu0 0
    %203 = vmatprep.subr.bf16.mxu0 0
    %204 = vmatpush1.bf16.msra.mxu0 0
    %205 = vmatprep.subr.bf16.mxu0 0
    %206 = vmatpush1.bf16.msra.mxu0 0
    %207 = vmatprep.subr.bf16.mxu0 0
    %208 = vmatpush1.bf16.msra.mxu0 0
    %209 = vmatprep.subr.bf16.mxu0 0
    %210 = vmatpush1.bf16.msra.mxu0 %v193
    %211 = vmatprep.subr.bf16.mxu0 0
    %212 = vmatpush2.bf16.msra.mxu0 0
    %213 = vmatprep.subr.bf16.mxu0 0
    %214 = vmatpush2.bf16.msra.mxu0 0
    %215 = vmatprep.subr.bf16.mxu0 0
    %216 = vmatpush2.bf16.msra.mxu0 0
    %217 = vmatprep.subr.bf16.mxu0 0
    %218 = vmatpush2.bf16.msra.mxu0 0
    %219 = vmatprep.subr.bf16.mxu0 0
    %220 = vmatpush2.bf16.msra.mxu0 0
    %221 = vmatprep.subr.bf16.mxu0 0
    %222 = vmatpush2.bf16.msra.mxu0 0
    %223 = vmatprep.subr.bf16.mxu0 0
    %224 = vmatpush2.bf16.msra.mxu0 0
    %225 = vmatprep.subr.bf16.mxu0 0
    %226 = vmatpush2.bf16.msra.mxu0 0
    %227 = vmatprep.mubr.bf16.mxu0 0
    %228 = vmatmul.mubr.bf16.gmra.mxu0 %v144
    %v229 = vpop.f32.mrf.mxu0
    %v230 = vadd.f32 0.0, %v229
    %v231 = vpop.f32.mrf.mxu0
    %v232 = vpop.f32.mrf.mxu0
    %v233 = vadd.f32 0.0, %v232
    %v234 = vpop.f32.mrf.mxu0
    %235 = vmatprep.mubr.bf16.mxu0 0
    %236 = vmatmul.mubr.bf16.gmra.mxu0 %v147
    %v237 = vpop.f32.mrf.mxu0
    %v238 = vadd.f32 0.0, %v237
    %v239 = vpop.f32.mrf.mxu0
    %v240 = vpop.f32.mrf.mxu0
    %v241 = vadd.f32 0.0, %v240
    %v242 = vpop.f32.mrf.mxu0
    %243 = vmatprep.mubr.bf16.mxu0 0
    %244 = vmatmul.mubr.bf16.gmra.mxu0 %v150
    %v245 = vpop.f32.mrf.mxu0
    %v246 = vadd.f32 0.0, %v245
    %v247 = vpop.f32.mrf.mxu0
    %v248 = vpop.f32.mrf.mxu0
    %v249 = vadd.f32 0.0, %v248
    %v250 = vpop.f32.mrf.mxu0
    %251 = vmatprep.mubr.bf16.mxu0 0
    %252 = vmatmul.mubr.bf16.gmra.mxu0 %v153
    %v253 = vpop.f32.mrf.mxu0
    %v254 = vadd.f32 0.0, %v253
    %v255 = vpop.f32.mrf.mxu0
    %v256 = vpop.f32.mrf.mxu0
    %v257 = vadd.f32 0.0, %v256
    %v258 = vpop.f32.mrf.mxu0
    %259 = vmatprep.mubr.bf16.mxu0 0
    %260 = vmatmul.mubr.bf16.gmra.mxu0 %v156
    %v261 = vpop.f32.mrf.mxu0
    %v262 = vadd.f32 0.0, %v261
    %v263 = vpop.f32.mrf.mxu0
    %v264 = vpop.f32.mrf.mxu0
    %v265 = vadd.f32 0.0, %v264
    %v266 = vpop.f32.mrf.mxu0
    %267 = vmatprep.mubr.bf16.mxu0 0
    %268 = vmatmul.mubr.bf16.gmra.mxu0 %v159
    %v269 = vpop.f32.mrf.mxu0
    %v270 = vadd.f32 0.0, %v269
    %v271 = vpop.f32.mrf.mxu0
    %v272 = vpop.f32.mrf.mxu0
    %v273 = vadd.f32 0.0, %v272
    %v274 = vpop.f32.mrf.mxu0
    %275 = vmatprep.mubr.bf16.mxu0 0
    %276 = vmatmul.mubr.bf16.gmra.mxu0 %v162
    %v277 = vpop.f32.mrf.mxu0
    %v278 = vadd.f32 0.0, %v277
    %v279 = vpop.f32.mrf.mxu0
    %v280 = vpop.f32.mrf.mxu0
    %v281 = vadd.f32 0.0, %v280
    %v282 = vpop.f32.mrf.mxu0
    %283 = vmatprep.mubr.bf16.mxu0 0
    %284 = vmatmul.mubr.bf16.gmra.mxu0 %v165
    %v285 = vpop.f32.mrf.mxu0
    %v286 = vadd.f32 0.0, %v285
    %v287 = vpop.f32.mrf.mxu0
    %v288 = vpop.f32.mrf.mxu0
    %v289 = vadd.f32 0.0, %v288
    %v290 = vpop.f32.mrf.mxu0
    %291 = vmatprep.mubr.bf16.mxu0 0
    %292 = vmatmul.mubr.bf16.gmra.mxu0 %v168
    %v293 = vpop.f32.mrf.mxu0
    %v294 = vadd.f32 0.0, %v293
    %v295 = vpop.f32.mrf.mxu0
    %v296 = vpop.f32.mrf.mxu0
    %v297 = vadd.f32 0.0, %v296
    %v298 = vpop.f32.mrf.mxu0
    %299 = vmatprep.mubr.bf16.mxu0 0
    %300 = vmatmul.mubr.bf16.gmra.mxu0 %v171
    %v301 = vpop.f32.mrf.mxu0
    %v302 = vadd.f32 0.0, %v301
    %v303 = vpop.f32.mrf.mxu0
    %v304 = vpop.f32.mrf.mxu0
    %v305 = vadd.f32 0.0, %v304
    %v306 = vpop.f32.mrf.mxu0
    %307 = vmatprep.mubr.bf16.mxu0 0
    %308 = vmatmul.mubr.bf16.gmra.mxu0 %v174
    %v309 = vpop.f32.mrf.mxu0
    %v310 = vadd.f32 0.0, %v309
    %v311 = vpop.f32.mrf.mxu0
    %v312 = vpop.f32.mrf.mxu0
    %v313 = vadd.f32 0.0, %v312
    %v314 = vpop.f32.mrf.mxu0
    %315 = vmatprep.mubr.bf16.mxu0 0
    %316 = vmatmul.mubr.bf16.gmra.mxu0 %v177
    %v317 = vpop.f32.mrf.mxu0
    %v318 = vadd.f32 0.0, %v317
    %v319 = vpop.f32.mrf.mxu0
    %v320 = vpop.f32.mrf.mxu0
    %v321 = vadd.f32 0.0, %v320
    %v322 = vpop.f32.mrf.mxu0
    %323 = vmatprep.mubr.bf16.mxu0 0
    %324 = vmatmul.mubr.bf16.gmra.mxu0 %v180
    %v325 = vpop.f32.mrf.mxu0
    %v326 = vadd.f32 0.0, %v325
    %v327 = vpop.f32.mrf.mxu0
    %v328 = vpop.f32.mrf.mxu0
    %v329 = vadd.f32 0.0, %v328
    %v330 = vpop.f32.mrf.mxu0
    %331 = vmatprep.mubr.bf16.mxu0 0
    %332 = vmatmul.mubr.bf16.gmra.mxu0 %v183
    %v333 = vpop.f32.mrf.mxu0
    %v334 = vadd.f32 0.0, %v333
    %v335 = vpop.f32.mrf.mxu0
    %v336 = vpop.f32.mrf.mxu0
    %v337 = vadd.f32 0.0, %v336
    %v338 = vpop.f32.mrf.mxu0
    %339 = vmatprep.mubr.bf16.mxu0 0
    %340 = vmatmul.mubr.bf16.gmra.mxu0 %v186
    %v341 = vpop.f32.mrf.mxu0
    %v342 = vadd.f32 0.0, %v341
    %v343 = vpop.f32.mrf.mxu0
    %v344 = vpop.f32.mrf.mxu0
    %v345 = vadd.f32 0.0, %v344
    %v346 = vpop.f32.mrf.mxu0
    %347 = vmatprep.mubr.bf16.mxu0 0
    %348 = vmatmul.mubr.bf16.gmra.mxu0 %v189
    %v349 = vpop.f32.mrf.mxu0
    %v350 = vadd.f32 0.0, %v349
    %v351 = vpop.f32.mrf.mxu0
    %v352 = vpop.f32.mrf.mxu0
    %v353 = vadd.f32 0.0, %v352
    %v354 = vpop.f32.mrf.mxu0
    %355 = vdwg.mxu0
    %vm356 = vcmask 523264
    %v357 = vsel %vm356, %v230, 0.0
    %v358 = vsel %vm356, %v233, 0.0
    %v359 = vadd.f32 %v357, %v358
    %v360 = vsel %vm356, %v238, 0.0
    %v361 = vadd.f32 %v359, %v360
    %v362 = vsel %vm356, %v241, 0.0
    %v363 = vadd.f32 %v361, %v362
    %v364 = vsel %vm356, %v246, 0.0
    %v365 = vadd.f32 %v363, %v364
    %v366 = vsel %vm356, %v249, 0.0
    %v367 = vadd.f32 %v365, %v366
    %v368 = vsel %vm356, %v254, 0.0
    %v369 = vadd.f32 %v367, %v368
    %v370 = vsel %vm356, %v257, 0.0
    %v371 = vadd.f32 %v369, %v370
    %v372 = vsel %vm356, %v262, 0.0
    %v373 = vadd.f32 %v371, %v372
    %v374 = vsel %vm356, %v265, 0.0
    %v375 = vadd.f32 %v373, %v374
    %v376 = vsel %vm356, %v270, 0.0
    %v377 = vadd.f32 %v375, %v376
    %v378 = vsel %vm356, %v273, 0.0
    %v379 = vadd.f32 %v377, %v378
    %v380 = vsel %vm356, %v278, 0.0
    %v381 = vadd.f32 %v379, %v380
    %v382 = vsel %vm356, %v281, 0.0
    %v383 = vadd.f32 %v381, %v382
    %v384 = vsel %vm356, %v286, 0.0
    %v385 = vadd.f32 %v383, %v384
    %v386 = vsel %vm356, %v289, 0.0
    %v387 = vadd.f32 %v385, %v386
    %v388 = vsel %vm356, %v294, 0.0
    %v389 = vadd.f32 %v387, %v388
    %v390 = vsel %vm356, %v297, 0.0
    %v391 = vadd.f32 %v389, %v390
    %v392 = vsel %vm356, %v302, 0.0
    %v393 = vadd.f32 %v391, %v392
    %v394 = vsel %vm356, %v305, 0.0
    %v395 = vadd.f32 %v393, %v394
    %v396 = vsel %vm356, %v310, 0.0
    %v397 = vadd.f32 %v395, %v396
    %v398 = vsel %vm356, %v313, 0.0
    %v399 = vadd.f32 %v397, %v398
    %v400 = vsel %vm356, %v318, 0.0
    %v401 = vadd.f32 %v399, %v400
    %v402 = vsel %vm356, %v321, 0.0
    %v403 = vadd.f32 %v401, %v402
    %v404 = vsel %vm356, %v326, 0.0
    %v405 = vadd.f32 %v403, %v404
    %v406 = vsel %vm356, %v329, 0.0
    %v407 = vadd.f32 %v405, %v406
    %v408 = vsel %vm356, %v334, 0.0
    %v409 = vadd.f32 %v407, %v408
    %v410 = vsel %vm356, %v337, 0.0
    %v411 = vadd.f32 %v409, %v410
    %v412 = vsel %vm356, %v342, 0.0
    %v413 = vadd.f32 %v411, %v412
    %v414 = vsel %vm356, %v345, 0.0
    %v415 = vadd.f32 %v413, %v414
    %v416 = vsel %vm356, %v350, 0.0
    %v417 = vadd.f32 %v415, %v416
    %v418 = vsel %vm356, %v353, 0.0
    %v419 = vadd.f32 %v417, %v418
    %v420 = vrot.slane %v419, 4
    %v421 = vadd.f32 %v419, %v420
    %v422 = vrot.slane %v421, 2
    %v423 = vadd.f32 %v421, %v422
    %v424 = vrot.slane %v423, 1
    %v425 = vadd.f32 %v423, %v424
    %v426 = vmul.f32 %v425, 0.00390625
    %v427 = vmul.f32 %v230, %v230
    %v428 = vmul.f32 %v233, %v233
    %v429 = vmul.f32 %v238, %v238
    %v430 = vmul.f32 %v241, %v241
    %v431 = vmul.f32 %v246, %v246
    %v432 = vmul.f32 %v249, %v249
    %v433 = vmul.f32 %v254, %v254
    %v434 = vmul.f32 %v257, %v257
    %v435 = vmul.f32 %v262, %v262
    %v436 = vmul.f32 %v265, %v265
    %v437 = vmul.f32 %v270, %v270
    %v438 = vmul.f32 %v273, %v273
    %v439 = vmul.f32 %v278, %v278
    %v440 = vmul.f32 %v281, %v281
    %v441 = vmul.f32 %v286, %v286
    %v442 = vmul.f32 %v289, %v289
    %v443 = vmul.f32 %v294, %v294
    %v444 = vmul.f32 %v297, %v297
    %v445 = vmul.f32 %v302, %v302
    %v446 = vmul.f32 %v305, %v305
    %v447 = vmul.f32 %v310, %v310
    %v448 = vmul.f32 %v313, %v313
    %v449 = vmul.f32 %v318, %v318
    %v450 = vmul.f32 %v321, %v321
    %v451 = vmul.f32 %v326, %v326
    %v452 = vmul.f32 %v329, %v329
    %v453 = vmul.f32 %v334, %v334
    %v454 = vmul.f32 %v337, %v337
    %v455 = vmul.f32 %v342, %v342
    %v456 = vmul.f32 %v345, %v345
    %v457 = vmul.f32 %v350, %v350
    %v458 = vmul.f32 %v353, %v353
    %v459 = vsel %vm356, %v427, 0.0
    %v460 = vsel %vm356, %v428, 0.0
    %v461 = vadd.f32 %v459, %v460
    %v462 = vsel %vm356, %v429, 0.0
    %v463 = vadd.f32 %v461, %v462
    %v464 = vsel %vm356, %v430, 0.0
    %v465 = vadd.f32 %v463, %v464
    %v466 = vsel %vm356, %v431, 0.0
    %v467 = vadd.f32 %v465, %v466
    %v468 = vsel %vm356, %v432, 0.0
    %v469 = vadd.f32 %v467, %v468
    %v470 = vsel %vm356, %v433, 0.0
    %v471 = vadd.f32 %v469, %v470
    %v472 = vsel %vm356, %v434, 0.0
    %v473 = vadd.f32 %v471, %v472
    %v474 = vsel %vm356, %v435, 0.0
    %v475 = vadd.f32 %v473, %v474
    %v476 = vsel %vm356, %v436, 0.0
    %v477 = vadd.f32 %v475, %v476
    %v478 = vsel %vm356, %v437, 0.0
    %v479 = vadd.f32 %v477, %v478
    %v480 = vsel %vm356, %v438, 0.0
    %v481 = vadd.f32 %v479, %v480
    %v482 = vsel %vm356, %v439, 0.0
    %v483 = vadd.f32 %v481, %v482
    %v484 = vsel %vm356, %v440, 0.0
    %v485 = vadd.f32 %v483, %v484
    %v486 = vsel %vm356, %v441, 0.0
    %v487 = vadd.f32 %v485, %v486
    %v488 = vsel %vm356, %v442, 0.0
    %v489 = vadd.f32 %v487, %v488
    %v490 = vsel %vm356, %v443, 0.0
    %v491 = vadd.f32 %v489, %v490
    %v492 = vsel %vm356, %v444, 0.0
    %v493 = vadd.f32 %v491, %v492
    %v494 = vsel %vm356, %v445, 0.0
    %v495 = vadd.f32 %v493, %v494
    %v496 = vsel %vm356, %v446, 0.0
    %v497 = vadd.f32 %v495, %v496
    %v498 = vsel %vm356, %v447, 0.0
    %v499 = vadd.f32 %v497, %v498
    %v500 = vsel %vm356, %v448, 0.0
    %v501 = vadd.f32 %v499, %v500
    %v502 = vsel %vm356, %v449, 0.0
    %v503 = vadd.f32 %v501, %v502
    %v504 = vsel %vm356, %v450, 0.0
    %v505 = vadd.f32 %v503, %v504
    %v506 = vsel %vm356, %v451, 0.0
    %v507 = vadd.f32 %v505, %v506
    %v508 = vsel %vm356, %v452, 0.0
    %v509 = vadd.f32 %v507, %v508
    %v510 = vsel %vm356, %v453, 0.0
    %v511 = vadd.f32 %v509, %v510
    %v512 = vsel %vm356, %v454, 0.0
    %v513 = vadd.f32 %v511, %v512
    %v514 = vsel %vm356, %v455, 0.0
    %v515 = vadd.f32 %v513, %v514
    %v516 = vsel %vm356, %v456, 0.0
    %v517 = vadd.f32 %v515, %v516
    %v518 = vsel %vm356, %v457, 0.0
    %v519 = vadd.f32 %v517, %v518
    %v520 = vsel %vm356, %v458, 0.0
    %v521 = vadd.f32 %v519, %v520
    %v522 = vrot.slane %v521, 4
    %v523 = vadd.f32 %v521, %v522
    %v524 = vrot.slane %v523, 2
    %v525 = vadd.f32 %v523, %v524
    %v526 = vrot.slane %v525, 1
    %v527 = vadd.f32 %v525, %v526
    %v528 = vmul.f32 %v527, 0.00390625
    %v529 = vmul.f32 %v426, %v426
    %v530 = vsub.f32 %v528, %v529
    %v531 = vmax.f32 %v530, 0.0
    %v532 = vadd.f32 %v531, 1e-05
    %v533 = vrsqrt.pop %v532
    %v534 = vmul.f32 %v61, %v533
    %v535 = vmul.f32 %v426, %v534
    %v537 = vrot.slane %v535, 7
    %v539 = vsub.f32 %v61, %v537
    %v540 = vlaneseq
    %v541 = vshrl.u32 %v540, 7
    %v542 = vsub.s32 0, %v541
    %v543 = vrot.slane %v534, %v542
    %v544 = vmul.f32 %v230, %v543
    %v545 = vmul.f32 %v233, %v543
    %v546 = vmul.f32 %v238, %v543
    %v547 = vmul.f32 %v241, %v543
    %v548 = vmul.f32 %v246, %v543
    %v549 = vmul.f32 %v249, %v543
    %v550 = vmul.f32 %v254, %v543
    %v551 = vmul.f32 %v257, %v543
    %v552 = vmul.f32 %v262, %v543
    %v553 = vmul.f32 %v265, %v543
    %v554 = vmul.f32 %v270, %v543
    %v555 = vmul.f32 %v273, %v543
    %v556 = vmul.f32 %v278, %v543
    %v557 = vmul.f32 %v281, %v543
    %v558 = vmul.f32 %v286, %v543
    %v559 = vmul.f32 %v289, %v543
    %v560 = vmul.f32 %v294, %v543
    %v561 = vmul.f32 %v297, %v543
    %v562 = vmul.f32 %v302, %v543
    %v563 = vmul.f32 %v305, %v543
    %v564 = vmul.f32 %v310, %v543
    %v565 = vmul.f32 %v313, %v543
    %v566 = vmul.f32 %v318, %v543
    %v567 = vmul.f32 %v321, %v543
    %v568 = vmul.f32 %v326, %v543
    %v569 = vmul.f32 %v329, %v543
    %v570 = vmul.f32 %v334, %v543
    %v571 = vmul.f32 %v337, %v543
    %v572 = vmul.f32 %v342, %v543
    %v573 = vmul.f32 %v345, %v543
    %v574 = vmul.f32 %v350, %v543
    %v575 = vmul.f32 %v353, %v543
    %v576 = vlaneseq
    %v577 = vshrl.u32 %v576, 7
    %v578 = vsub.s32 1, %v577
    %v579 = vrot.slane %v539, %v578
    %v580 = vadd.f32 %v544, %v579
    %v581 = vadd.f32 %v545, %v579
    %v582 = vadd.f32 %v546, %v579
    %v583 = vadd.f32 %v547, %v579
    %v584 = vadd.f32 %v548, %v579
    %v585 = vadd.f32 %v549, %v579
    %v586 = vadd.f32 %v550, %v579
    %v587 = vadd.f32 %v551, %v579
    %v588 = vadd.f32 %v552, %v579
    %v589 = vadd.f32 %v553, %v579
    %v590 = vadd.f32 %v554, %v579
    %v591 = vadd.f32 %v555, %v579
    %v592 = vadd.f32 %v556, %v579
    %v593 = vadd.f32 %v557, %v579
    %v594 = vadd.f32 %v558, %v579
    %v595 = vadd.f32 %v559, %v579
    %v596 = vadd.f32 %v560, %v579
    %v597 = vadd.f32 %v561, %v579
    %v598 = vadd.f32 %v562, %v579
    %v599 = vadd.f32 %v563, %v579
    %v600 = vadd.f32 %v564, %v579
    %v601 = vadd.f32 %v565, %v579
    %v602 = vadd.f32 %v566, %v579
    %v603 = vadd.f32 %v567, %v579
    %v604 = vadd.f32 %v568, %v579
    %v605 = vadd.f32 %v569, %v579
    %v606 = vadd.f32 %v570, %v579
    %v607 = vadd.f32 %v571, %v579
    %v608 = vadd.f32 %v572, %v579
    %v609 = vadd.f32 %v573, %v579
    %v610 = vadd.f32 %v574, %v579
    %v611 = vadd.f32 %v575, %v579
    %v612 = vmax.f32 %v580, 0.0
    %v613 = vmax.f32 %v581, 0.0
    %v614 = vmax.f32 %v582, 0.0
    %v615 = vmax.f32 %v583, 0.0
    %v616 = vmax.f32 %v584, 0.0
    %v617 = vmax.f32 %v585, 0.0
    %v618 = vmax.f32 %v586, 0.0
    %v619 = vmax.f32 %v587, 0.0
    %v620 = vmax.f32 %v588, 0.0
    %v621 = vmax.f32 %v589, 0.0
    %v622 = vmax.f32 %v590, 0.0
    %v623 = vmax.f32 %v591, 0.0
    %v624 = vmax.f32 %v592, 0.0
    %v625 = vmax.f32 %v593, 0.0
    %v626 = vmax.f32 %v594, 0.0
    %v627 = vmax.f32 %v595, 0.0
    %v628 = vmax.f32 %v596, 0.0
    %v629 = vmax.f32 %v597, 0.0
    %v630 = vmax.f32 %v598, 0.0
    %v631 = vmax.f32 %v599, 0.0
    %v632 = vmax.f32 %v600, 0.0
    %v633 = vmax.f32 %v601, 0.0
    %v634 = vmax.f32 %v602, 0.0
    %v635 = vmax.f32 %v603, 0.0
    %v636 = vmax.f32 %v604, 0.0
    %v637 = vmax.f32 %v605, 0.0
    %v638 = vmax.f32 %v606, 0.0
    %v639 = vmax.f32 %v607, 0.0
    %v640 = vmax.f32 %v608, 0.0
    %v641 = vmax.f32 %v609, 0.0
    %v642 = vmax.f32 %v610, 0.0
    %v643 = vmax.f32 %v611, 0.0
    %v644 = vpack.c.bf16 %v613, %v612
    %v645 = vpack.c.bf16 %v615, %v614
    %v646 = vpack.c.bf16 %v617, %v616
    %v647 = vpack.c.bf16 %v619, %v618
    %v648 = vpack.c.bf16 %v621, %v620
    %v649 = vpack.c.bf16 %v623, %v622
    %v650 = vpack.c.bf16 %v625, %v624
    %v651 = vpack.c.bf16 %v627, %v626
    %v652 = vpack.c.bf16 %v629, %v628
    %v653 = vpack.c.bf16 %v631, %v630
    %v654 = vpack.c.bf16 %v633, %v632
    %v655 = vpack.c.bf16 %v635, %v634
    %v656 = vpack.c.bf16 %v637, %v636
    %v657 = vpack.c.bf16 %v639, %v638
    %v658 = vpack.c.bf16 %v641, %v640
    %v659 = vpack.c.bf16 %v643, %v642
    %v660 = vld [vmem:[%s3] sm:$0xf]
    %v661 = vld [vmem:[%s3 + $0x4] sm:$0xf]
    %v662 = vld [vmem:[%s3 + $0x8] sm:$0xf]
    %v663 = vld [vmem:[%s3 + $0xc] sm:$0xf]
    %v664 = vld [vmem:[%s3 + $0x10] sm:$0xf]
    %v665 = vld [vmem:[%s3 + $0x14] sm:$0xf]
    %v666 = vld [vmem:[%s3 + $0x18] sm:$0xf]
    %v667 = vld [vmem:[%s3 + $0x1c] sm:$0xf]
    %v668 = vld [vmem:[%s4] sm:$0x3]
    %v677 = vunpack.c.l.b16 %v660
    %v678 = vunpack.c.l.b16 %v661
    %v679 = vunpack.c.l.b16 %v662
    %v680 = vunpack.c.l.b16 %v663
    %v681 = vunpack.c.l.b16 %v664
    %v682 = vunpack.c.l.b16 %v665
    %v683 = vunpack.c.l.b16 %v666
    %v684 = vunpack.c.l.b16 %v667
    %v685 = vpack.c.b16 %v678, %v677
    %v686 = vpack.c.b16 %v680, %v679
    %v687 = vpack.c.b16 %v682, %v681
    %v688 = vpack.c.b16 %v684, %v683
    %v694 = vsel %vm356, %v644, 0
    %v697 = vsel %vm356, %v645, 0
    %v700 = vsel %vm356, %v646, 0
    %v703 = vsel %vm356, %v647, 0
    %v706 = vsel %vm356, %v648, 0
    %v709 = vsel %vm356, %v649, 0
    %v712 = vsel %vm356, %v650, 0
    %v715 = vsel %vm356, %v651, 0
    %v718 = vsel %vm356, %v652, 0
    %v721 = vsel %vm356, %v653, 0
    %v724 = vsel %vm356, %v654, 0
    %v727 = vsel %vm356, %v655, 0
    %v730 = vsel %vm356, %v656, 0
    %v733 = vsel %vm356, %v657, 0
    %v736 = vsel %vm356, %v658, 0
    %v739 = vsel %vm356, %v659, 0
    %741 = vmatprep.subr.bf16.mxu0 0
    %742 = vmatpush1.bf16.msra.mxu0 0
    %743 = vmatprep.subr.bf16.mxu0 0
    %744 = vmatpush1.bf16.msra.mxu0 0
    %745 = vmatprep.subr.bf16.mxu0 0
    %746 = vmatpush1.bf16.msra.mxu0 0
    %747 = vmatprep.subr.bf16.mxu0 0
    %748 = vmatpush1.bf16.msra.mxu0 0
    %749 = vmatprep.subr.bf16.mxu0 0
    %750 = vmatpush1.bf16.msra.mxu0 %v688
    %751 = vmatprep.subr.bf16.mxu0 0
    %752 = vmatpush1.bf16.msra.mxu0 %v687
    %753 = vmatprep.subr.bf16.mxu0 0
    %754 = vmatpush1.bf16.msra.mxu0 %v686
    %755 = vmatprep.subr.bf16.mxu0 0
    %756 = vmatpush1.bf16.msra.mxu0 %v685
    %757 = vmatprep.subr.bf16.mxu0 0
    %758 = vmatpush2.bf16.msra.mxu0 0
    %759 = vmatprep.subr.bf16.mxu0 0
    %760 = vmatpush2.bf16.msra.mxu0 0
    %761 = vmatprep.subr.bf16.mxu0 0
    %762 = vmatpush2.bf16.msra.mxu0 0
    %763 = vmatprep.subr.bf16.mxu0 0
    %764 = vmatpush2.bf16.msra.mxu0 0
    %765 = vmatprep.subr.bf16.mxu0 0
    %766 = vmatpush2.bf16.msra.mxu0 0
    %767 = vmatprep.subr.bf16.mxu0 0
    %768 = vmatpush2.bf16.msra.mxu0 0
    %769 = vmatprep.subr.bf16.mxu0 0
    %770 = vmatpush2.bf16.msra.mxu0 0
    %771 = vmatprep.subr.bf16.mxu0 0
    %772 = vmatpush2.bf16.msra.mxu0 0
    %773 = vmatprep.mubr.bf16.mxu0 0
    %774 = vmatmul.mubr.bf16.gmra.mxu0 %v694
    %v775 = vpop.f32.mrf.mxu0
    %v776 = vadd.f32 0.0, %v775
    %v777 = vpop.f32.mrf.mxu0
    %v778 = vpop.f32.mrf.mxu0
    %v779 = vadd.f32 0.0, %v778
    %v780 = vpop.f32.mrf.mxu0
    %781 = vmatprep.mubr.bf16.mxu0 0
    %782 = vmatmul.mubr.bf16.gmra.mxu0 %v697
    %v783 = vpop.f32.mrf.mxu0
    %v784 = vadd.f32 0.0, %v783
    %v785 = vpop.f32.mrf.mxu0
    %v786 = vpop.f32.mrf.mxu0
    %v787 = vadd.f32 0.0, %v786
    %v788 = vpop.f32.mrf.mxu0
    %789 = vmatprep.mubr.bf16.mxu0 0
    %790 = vmatmul.mubr.bf16.gmra.mxu0 %v700
    %v791 = vpop.f32.mrf.mxu0
    %v792 = vadd.f32 0.0, %v791
    %v793 = vpop.f32.mrf.mxu0
    %v794 = vpop.f32.mrf.mxu0
    %v795 = vadd.f32 0.0, %v794
    %v796 = vpop.f32.mrf.mxu0
    %797 = vmatprep.mubr.bf16.mxu0 0
    %798 = vmatmul.mubr.bf16.gmra.mxu0 %v703
    %v799 = vpop.f32.mrf.mxu0
    %v800 = vadd.f32 0.0, %v799
    %v801 = vpop.f32.mrf.mxu0
    %v802 = vpop.f32.mrf.mxu0
    %v803 = vadd.f32 0.0, %v802
    %v804 = vpop.f32.mrf.mxu0
    %805 = vmatprep.mubr.bf16.mxu0 0
    %806 = vmatmul.mubr.bf16.gmra.mxu0 %v706
    %v807 = vpop.f32.mrf.mxu0
    %v808 = vadd.f32 0.0, %v807
    %v809 = vpop.f32.mrf.mxu0
    %v810 = vpop.f32.mrf.mxu0
    %v811 = vadd.f32 0.0, %v810
    %v812 = vpop.f32.mrf.mxu0
    %813 = vmatprep.mubr.bf16.mxu0 0
    %814 = vmatmul.mubr.bf16.gmra.mxu0 %v709
    %v815 = vpop.f32.mrf.mxu0
    %v816 = vadd.f32 0.0, %v815
    %v817 = vpop.f32.mrf.mxu0
    %v818 = vpop.f32.mrf.mxu0
    %v819 = vadd.f32 0.0, %v818
    %v820 = vpop.f32.mrf.mxu0
    %821 = vmatprep.mubr.bf16.mxu0 0
    %822 = vmatmul.mubr.bf16.gmra.mxu0 %v712
    %v823 = vpop.f32.mrf.mxu0
    %v824 = vadd.f32 0.0, %v823
    %v825 = vpop.f32.mrf.mxu0
    %v826 = vpop.f32.mrf.mxu0
    %v827 = vadd.f32 0.0, %v826
    %v828 = vpop.f32.mrf.mxu0
    %829 = vmatprep.mubr.bf16.mxu0 0
    %830 = vmatmul.mubr.bf16.gmra.mxu0 %v715
    %v831 = vpop.f32.mrf.mxu0
    %v832 = vadd.f32 0.0, %v831
    %v833 = vpop.f32.mrf.mxu0
    %v834 = vpop.f32.mrf.mxu0
    %v835 = vadd.f32 0.0, %v834
    %v836 = vpop.f32.mrf.mxu0
    %837 = vmatprep.mubr.bf16.mxu0 0
    %838 = vmatmul.mubr.bf16.gmra.mxu0 %v718
    %v839 = vpop.f32.mrf.mxu0
    %v840 = vadd.f32 0.0, %v839
    %v841 = vpop.f32.mrf.mxu0
    %v842 = vpop.f32.mrf.mxu0
    %v843 = vadd.f32 0.0, %v842
    %v844 = vpop.f32.mrf.mxu0
    %845 = vmatprep.mubr.bf16.mxu0 0
    %846 = vmatmul.mubr.bf16.gmra.mxu0 %v721
    %v847 = vpop.f32.mrf.mxu0
    %v848 = vadd.f32 0.0, %v847
    %v849 = vpop.f32.mrf.mxu0
    %v850 = vpop.f32.mrf.mxu0
    %v851 = vadd.f32 0.0, %v850
    %v852 = vpop.f32.mrf.mxu0
    %853 = vmatprep.mubr.bf16.mxu0 0
    %854 = vmatmul.mubr.bf16.gmra.mxu0 %v724
    %v855 = vpop.f32.mrf.mxu0
    %v856 = vadd.f32 0.0, %v855
    %v857 = vpop.f32.mrf.mxu0
    %v858 = vpop.f32.mrf.mxu0
    %v859 = vadd.f32 0.0, %v858
    %v860 = vpop.f32.mrf.mxu0
    %861 = vmatprep.mubr.bf16.mxu0 0
    %862 = vmatmul.mubr.bf16.gmra.mxu0 %v727
    %v863 = vpop.f32.mrf.mxu0
    %v864 = vadd.f32 0.0, %v863
    %v865 = vpop.f32.mrf.mxu0
    %v866 = vpop.f32.mrf.mxu0
    %v867 = vadd.f32 0.0, %v866
    %v868 = vpop.f32.mrf.mxu0
    %869 = vmatprep.mubr.bf16.mxu0 0
    %870 = vmatmul.mubr.bf16.gmra.mxu0 %v730
    %v871 = vpop.f32.mrf.mxu0
    %v872 = vadd.f32 0.0, %v871
    %v873 = vpop.f32.mrf.mxu0
    %v874 = vpop.f32.mrf.mxu0
    %v875 = vadd.f32 0.0, %v874
    %v876 = vpop.f32.mrf.mxu0
    %877 = vmatprep.mubr.bf16.mxu0 0
    %878 = vmatmul.mubr.bf16.gmra.mxu0 %v733
    %v879 = vpop.f32.mrf.mxu0
    %v880 = vadd.f32 0.0, %v879
    %v881 = vpop.f32.mrf.mxu0
    %v882 = vpop.f32.mrf.mxu0
    %v883 = vadd.f32 0.0, %v882
    %v884 = vpop.f32.mrf.mxu0
    %885 = vmatprep.mubr.bf16.mxu0 0
    %886 = vmatmul.mubr.bf16.gmra.mxu0 %v736
    %v887 = vpop.f32.mrf.mxu0
    %v888 = vadd.f32 0.0, %v887
    %v889 = vpop.f32.mrf.mxu0
    %v890 = vpop.f32.mrf.mxu0
    %v891 = vadd.f32 0.0, %v890
    %v892 = vpop.f32.mrf.mxu0
    %893 = vmatprep.mubr.bf16.mxu0 0
    %894 = vmatmul.mubr.bf16.gmra.mxu0 %v739
    %v895 = vpop.f32.mrf.mxu0
    %v896 = vadd.f32 0.0, %v895
    %v897 = vpop.f32.mrf.mxu0
    %v898 = vpop.f32.mrf.mxu0
    %v899 = vadd.f32 0.0, %v898
    %v900 = vpop.f32.mrf.mxu0
    %901 = vdwg.mxu0
    %v902 = vadd.f32 %v776, %v779
    %v903 = vadd.f32 %v902, %v784
    %v904 = vadd.f32 %v903, %v787
    %v905 = vadd.f32 %v904, %v792
    %v906 = vadd.f32 %v905, %v795
    %v907 = vadd.f32 %v906, %v800
    %v908 = vadd.f32 %v907, %v803
    %v909 = vadd.f32 %v908, %v808
    %v910 = vadd.f32 %v909, %v811
    %v911 = vadd.f32 %v910, %v816
    %v912 = vadd.f32 %v911, %v819
    %v913 = vadd.f32 %v912, %v824
    %v914 = vadd.f32 %v913, %v827
    %v915 = vadd.f32 %v914, %v832
    %v916 = vadd.f32 %v915, %v835
    %v917 = vadd.f32 %v916, %v840
    %v918 = vadd.f32 %v917, %v843
    %v919 = vadd.f32 %v918, %v848
    %v920 = vadd.f32 %v919, %v851
    %v921 = vadd.f32 %v920, %v856
    %v922 = vadd.f32 %v921, %v859
    %v923 = vadd.f32 %v922, %v864
    %v924 = vadd.f32 %v923, %v867
    %v925 = vadd.f32 %v924, %v872
    %v926 = vadd.f32 %v925, %v875
    %v927 = vadd.f32 %v926, %v880
    %v928 = vadd.f32 %v927, %v883
    %v929 = vadd.f32 %v928, %v888
    %v930 = vadd.f32 %v929, %v891
    %v931 = vadd.f32 %v930, %v896
    %v932 = vadd.f32 %v931, %v899
    %v933 = vrot.slane %v932, 4
    %v934 = vadd.f32 %v932, %v933
    %v935 = vrot.slane %v934, 2
    %v936 = vadd.f32 %v934, %v935
    %v937 = vrot.slane %v936, 1
    %v938 = vadd.f32 %v936, %v937
    %v939 = vmul.f32 %v938, 0.00390625
    %v940 = vmul.f32 %v776, %v776
    %v941 = vmul.f32 %v779, %v779
    %v942 = vmul.f32 %v784, %v784
    %v943 = vmul.f32 %v787, %v787
    %v944 = vmul.f32 %v792, %v792
    %v945 = vmul.f32 %v795, %v795
    %v946 = vmul.f32 %v800, %v800
    %v947 = vmul.f32 %v803, %v803
    %v948 = vmul.f32 %v808, %v808
    %v949 = vmul.f32 %v811, %v811
    %v950 = vmul.f32 %v816, %v816
    %v951 = vmul.f32 %v819, %v819
    %v952 = vmul.f32 %v824, %v824
    %v953 = vmul.f32 %v827, %v827
    %v954 = vmul.f32 %v832, %v832
    %v955 = vmul.f32 %v835, %v835
    %v956 = vmul.f32 %v840, %v840
    %v957 = vmul.f32 %v843, %v843
    %v958 = vmul.f32 %v848, %v848
    %v959 = vmul.f32 %v851, %v851
    %v960 = vmul.f32 %v856, %v856
    %v961 = vmul.f32 %v859, %v859
    %v962 = vmul.f32 %v864, %v864
    %v963 = vmul.f32 %v867, %v867
    %v964 = vmul.f32 %v872, %v872
    %v965 = vmul.f32 %v875, %v875
    %v966 = vmul.f32 %v880, %v880
    %v967 = vmul.f32 %v883, %v883
    %v968 = vmul.f32 %v888, %v888
    %v969 = vmul.f32 %v891, %v891
    %v970 = vmul.f32 %v896, %v896
    %v971 = vmul.f32 %v899, %v899
    %v972 = vadd.f32 %v940, %v941
    %v973 = vadd.f32 %v972, %v942
    %v974 = vadd.f32 %v973, %v943
    %v975 = vadd.f32 %v974, %v944
    %v976 = vadd.f32 %v975, %v945
    %v977 = vadd.f32 %v976, %v946
    %v978 = vadd.f32 %v977, %v947
    %v979 = vadd.f32 %v978, %v948
    %v980 = vadd.f32 %v979, %v949
    %v981 = vadd.f32 %v980, %v950
    %v982 = vadd.f32 %v981, %v951
    %v983 = vadd.f32 %v982, %v952
    %v984 = vadd.f32 %v983, %v953
    %v985 = vadd.f32 %v984, %v954
    %v986 = vadd.f32 %v985, %v955
    %v987 = vadd.f32 %v986, %v956
    %v988 = vadd.f32 %v987, %v957
    %v989 = vadd.f32 %v988, %v958
    %v990 = vadd.f32 %v989, %v959
    %v991 = vadd.f32 %v990, %v960
    %v992 = vadd.f32 %v991, %v961
    %v993 = vadd.f32 %v992, %v962
    %v994 = vadd.f32 %v993, %v963
    %v995 = vadd.f32 %v994, %v964
    %v996 = vadd.f32 %v995, %v965
    %v997 = vadd.f32 %v996, %v966
    %v998 = vadd.f32 %v997, %v967
    %v999 = vadd.f32 %v998, %v968
    %v1000 = vadd.f32 %v999, %v969
    %v1001 = vadd.f32 %v1000, %v970
    %v1002 = vadd.f32 %v1001, %v971
    %v1003 = vrot.slane %v1002, 4
    %v1004 = vadd.f32 %v1002, %v1003
    %v1005 = vrot.slane %v1004, 2
    %v1006 = vadd.f32 %v1004, %v1005
    %v1007 = vrot.slane %v1006, 1
    %v1008 = vadd.f32 %v1006, %v1007
    %v1009 = vmul.f32 %v1008, 0.00390625
    %v1010 = vmul.f32 %v939, %v939
    %v1011 = vsub.f32 %v1009, %v1010
    %v1012 = vmax.f32 %v1011, 0.0
    %v1013 = vadd.f32 %v1012, 1e-05
    %v1014 = vrsqrt.pop %v1013
    %v1015 = vmul.f32 %v668, %v1014
    %v1016 = vmul.f32 %v939, %v1015
    %v1018 = vrot.slane %v1016, 7
    %v1020 = vsub.f32 %v668, %v1018
    %v1021 = vlaneseq
    %v1022 = vshrl.u32 %v1021, 7
    %v1023 = vsub.s32 0, %v1022
    %v1024 = vrot.slane %v1015, %v1023
    %v1025 = vmul.f32 %v776, %v1024
    %v1026 = vmul.f32 %v779, %v1024
    %v1027 = vmul.f32 %v784, %v1024
    %v1028 = vmul.f32 %v787, %v1024
    %v1029 = vmul.f32 %v792, %v1024
    %v1030 = vmul.f32 %v795, %v1024
    %v1031 = vmul.f32 %v800, %v1024
    %v1032 = vmul.f32 %v803, %v1024
    %v1033 = vmul.f32 %v808, %v1024
    %v1034 = vmul.f32 %v811, %v1024
    %v1035 = vmul.f32 %v816, %v1024
    %v1036 = vmul.f32 %v819, %v1024
    %v1037 = vmul.f32 %v824, %v1024
    %v1038 = vmul.f32 %v827, %v1024
    %v1039 = vmul.f32 %v832, %v1024
    %v1040 = vmul.f32 %v835, %v1024
    %v1041 = vmul.f32 %v840, %v1024
    %v1042 = vmul.f32 %v843, %v1024
    %v1043 = vmul.f32 %v848, %v1024
    %v1044 = vmul.f32 %v851, %v1024
    %v1045 = vmul.f32 %v856, %v1024
    %v1046 = vmul.f32 %v859, %v1024
    %v1047 = vmul.f32 %v864, %v1024
    %v1048 = vmul.f32 %v867, %v1024
    %v1049 = vmul.f32 %v872, %v1024
    %v1050 = vmul.f32 %v875, %v1024
    %v1051 = vmul.f32 %v880, %v1024
    %v1052 = vmul.f32 %v883, %v1024
    %v1053 = vmul.f32 %v888, %v1024
    %v1054 = vmul.f32 %v891, %v1024
    %v1055 = vmul.f32 %v896, %v1024
    %v1056 = vmul.f32 %v899, %v1024
    %v1057 = vlaneseq
    %v1058 = vshrl.u32 %v1057, 7
    %v1059 = vsub.s32 1, %v1058
    %v1060 = vrot.slane %v1020, %v1059
    %v1061 = vadd.f32 %v1025, %v1060
    %v1062 = vadd.f32 %v1026, %v1060
    %v1063 = vadd.f32 %v1027, %v1060
    %v1064 = vadd.f32 %v1028, %v1060
    %v1065 = vadd.f32 %v1029, %v1060
    %v1066 = vadd.f32 %v1030, %v1060
    %v1067 = vadd.f32 %v1031, %v1060
    %v1068 = vadd.f32 %v1032, %v1060
    %v1069 = vadd.f32 %v1033, %v1060
    %v1070 = vadd.f32 %v1034, %v1060
    %v1071 = vadd.f32 %v1035, %v1060
    %v1072 = vadd.f32 %v1036, %v1060
    %v1073 = vadd.f32 %v1037, %v1060
    %v1074 = vadd.f32 %v1038, %v1060
    %v1075 = vadd.f32 %v1039, %v1060
    %v1076 = vadd.f32 %v1040, %v1060
    %v1077 = vadd.f32 %v1041, %v1060
    %v1078 = vadd.f32 %v1042, %v1060
    %v1079 = vadd.f32 %v1043, %v1060
    %v1080 = vadd.f32 %v1044, %v1060
    %v1081 = vadd.f32 %v1045, %v1060
    %v1082 = vadd.f32 %v1046, %v1060
    %v1083 = vadd.f32 %v1047, %v1060
    %v1084 = vadd.f32 %v1048, %v1060
    %v1085 = vadd.f32 %v1049, %v1060
    %v1086 = vadd.f32 %v1050, %v1060
    %v1087 = vadd.f32 %v1051, %v1060
    %v1088 = vadd.f32 %v1052, %v1060
    %v1089 = vadd.f32 %v1053, %v1060
    %v1090 = vadd.f32 %v1054, %v1060
    %v1091 = vadd.f32 %v1055, %v1060
    %v1092 = vadd.f32 %v1056, %v1060
    %v1093 = vmax.f32 %v1061, 0.0
    %v1094 = vmax.f32 %v1062, 0.0
    %v1095 = vmax.f32 %v1063, 0.0
    %v1096 = vmax.f32 %v1064, 0.0
    %v1097 = vmax.f32 %v1065, 0.0
    %v1098 = vmax.f32 %v1066, 0.0
    %v1099 = vmax.f32 %v1067, 0.0
    %v1100 = vmax.f32 %v1068, 0.0
    %v1101 = vmax.f32 %v1069, 0.0
    %v1102 = vmax.f32 %v1070, 0.0
    %v1103 = vmax.f32 %v1071, 0.0
    %v1104 = vmax.f32 %v1072, 0.0
    %v1105 = vmax.f32 %v1073, 0.0
    %v1106 = vmax.f32 %v1074, 0.0
    %v1107 = vmax.f32 %v1075, 0.0
    %v1108 = vmax.f32 %v1076, 0.0
    %v1109 = vmax.f32 %v1077, 0.0
    %v1110 = vmax.f32 %v1078, 0.0
    %v1111 = vmax.f32 %v1079, 0.0
    %v1112 = vmax.f32 %v1080, 0.0
    %v1113 = vmax.f32 %v1081, 0.0
    %v1114 = vmax.f32 %v1082, 0.0
    %v1115 = vmax.f32 %v1083, 0.0
    %v1116 = vmax.f32 %v1084, 0.0
    %v1117 = vmax.f32 %v1085, 0.0
    %v1118 = vmax.f32 %v1086, 0.0
    %v1119 = vmax.f32 %v1087, 0.0
    %v1120 = vmax.f32 %v1088, 0.0
    %v1121 = vmax.f32 %v1089, 0.0
    %v1122 = vmax.f32 %v1090, 0.0
    %v1123 = vmax.f32 %v1091, 0.0
    %v1124 = vmax.f32 %v1092, 0.0
    %v1125 = vpack.c.bf16 %v1094, %v1093
    %v1126 = vpack.c.bf16 %v1096, %v1095
    %v1127 = vpack.c.bf16 %v1098, %v1097
    %v1128 = vpack.c.bf16 %v1100, %v1099
    %v1129 = vpack.c.bf16 %v1102, %v1101
    %v1130 = vpack.c.bf16 %v1104, %v1103
    %v1131 = vpack.c.bf16 %v1106, %v1105
    %v1132 = vpack.c.bf16 %v1108, %v1107
    %v1133 = vpack.c.bf16 %v1110, %v1109
    %v1134 = vpack.c.bf16 %v1112, %v1111
    %v1135 = vpack.c.bf16 %v1114, %v1113
    %v1136 = vpack.c.bf16 %v1116, %v1115
    %v1137 = vpack.c.bf16 %v1118, %v1117
    %v1138 = vpack.c.bf16 %v1120, %v1119
    %v1139 = vpack.c.bf16 %v1122, %v1121
    %v1140 = vpack.c.bf16 %v1124, %v1123
    %v1141 = vld [vmem:[%s5] sm:$0xf]
    %v1142 = vld [vmem:[%s5 + $0x4] sm:$0xf]
    %v1143 = vld [vmem:[%s5 + $0x8] sm:$0xf]
    %v1144 = vld [vmem:[%s5 + $0xc] sm:$0xf]
    %v1145 = vld [vmem:[%s5 + $0x10] sm:$0xf]
    %v1146 = vld [vmem:[%s5 + $0x14] sm:$0xf]
    %v1147 = vld [vmem:[%s5 + $0x18] sm:$0xf]
    %v1148 = vld [vmem:[%s5 + $0x1c] sm:$0xf]
    %v1149 = vld [vmem:[%s5 + $0x20] sm:$0xf]
    %v1150 = vld [vmem:[%s5 + $0x24] sm:$0xf]
    %v1151 = vld [vmem:[%s5 + $0x28] sm:$0xf]
    %v1152 = vld [vmem:[%s5 + $0x2c] sm:$0xf]
    %v1153 = vld [vmem:[%s5 + $0x30] sm:$0xf]
    %v1154 = vld [vmem:[%s5 + $0x34] sm:$0xf]
    %v1155 = vld [vmem:[%s5 + $0x38] sm:$0xf]
    %v1156 = vld [vmem:[%s5 + $0x3c] sm:$0xf]
    %v1157 = vld [vmem:[%s6] sm:$0x3]
    %v1174 = vunpack.c.l.b16 %v1141
    %v1175 = vunpack.c.l.b16 %v1142
    %v1176 = vunpack.c.l.b16 %v1143
    %v1177 = vunpack.c.l.b16 %v1144
    %v1178 = vunpack.c.l.b16 %v1145
    %v1179 = vunpack.c.l.b16 %v1146
    %v1180 = vunpack.c.l.b16 %v1147
    %v1181 = vunpack.c.l.b16 %v1148
    %v1182 = vunpack.c.l.b16 %v1149
    %v1183 = vunpack.c.l.b16 %v1150
    %v1184 = vunpack.c.l.b16 %v1151
    %v1185 = vunpack.c.l.b16 %v1152
    %v1186 = vunpack.c.l.b16 %v1153
    %v1187 = vunpack.c.l.b16 %v1154
    %v1188 = vunpack.c.l.b16 %v1155
    %v1189 = vunpack.c.l.b16 %v1156
    %v1190 = vpack.c.b16 %v1175, %v1174
    %v1191 = vpack.c.b16 %v1177, %v1176
    %v1192 = vpack.c.b16 %v1179, %v1178
    %v1193 = vpack.c.b16 %v1181, %v1180
    %v1194 = vpack.c.b16 %v1183, %v1182
    %v1195 = vpack.c.b16 %v1185, %v1184
    %v1196 = vpack.c.b16 %v1187, %v1186
    %v1197 = vpack.c.b16 %v1189, %v1188
    %1206 = vmatprep.subr.bf16.mxu0 0
    %1207 = vmatpush1.bf16.msra.mxu0 %v1197
    %1208 = vmatprep.subr.bf16.mxu0 0
    %1209 = vmatpush1.bf16.msra.mxu0 %v1196
    %1210 = vmatprep.subr.bf16.mxu0 0
    %1211 = vmatpush1.bf16.msra.mxu0 %v1195
    %1212 = vmatprep.subr.bf16.mxu0 0
    %1213 = vmatpush1.bf16.msra.mxu0 %v1194
    %1214 = vmatprep.subr.bf16.mxu0 0
    %1215 = vmatpush1.bf16.msra.mxu0 %v1193
    %1216 = vmatprep.subr.bf16.mxu0 0
    %1217 = vmatpush1.bf16.msra.mxu0 %v1192
    %1218 = vmatprep.subr.bf16.mxu0 0
    %1219 = vmatpush1.bf16.msra.mxu0 %v1191
    %1220 = vmatprep.subr.bf16.mxu0 0
    %1221 = vmatpush1.bf16.msra.mxu0 %v1190
    %1222 = vmatprep.subr.bf16.mxu0 0
    %1223 = vmatpush2.bf16.msra.mxu0 0
    %1224 = vmatprep.subr.bf16.mxu0 0
    %1225 = vmatpush2.bf16.msra.mxu0 0
    %1226 = vmatprep.subr.bf16.mxu0 0
    %1227 = vmatpush2.bf16.msra.mxu0 0
    %1228 = vmatprep.subr.bf16.mxu0 0
    %1229 = vmatpush2.bf16.msra.mxu0 0
    %1230 = vmatprep.subr.bf16.mxu0 0
    %1231 = vmatpush2.bf16.msra.mxu0 0
    %1232 = vmatprep.subr.bf16.mxu0 0
    %1233 = vmatpush2.bf16.msra.mxu0 0
    %1234 = vmatprep.subr.bf16.mxu0 0
    %1235 = vmatpush2.bf16.msra.mxu0 0
    %1236 = vmatprep.subr.bf16.mxu0 0
    %1237 = vmatpush2.bf16.msra.mxu0 0
    %1238 = vmatprep.mubr.bf16.mxu0 0
    %1239 = vmatmul.mubr.bf16.gmra.mxu0 %v1125
    %v1240 = vpop.f32.mrf.mxu0
    %v1241 = vadd.f32 0.0, %v1240
    %v1242 = vpop.f32.mrf.mxu0
    %v1243 = vpop.f32.mrf.mxu0
    %v1244 = vadd.f32 0.0, %v1243
    %v1245 = vpop.f32.mrf.mxu0
    %1246 = vmatprep.mubr.bf16.mxu0 0
    %1247 = vmatmul.mubr.bf16.gmra.mxu0 %v1126
    %v1248 = vpop.f32.mrf.mxu0
    %v1249 = vadd.f32 0.0, %v1248
    %v1250 = vpop.f32.mrf.mxu0
    %v1251 = vpop.f32.mrf.mxu0
    %v1252 = vadd.f32 0.0, %v1251
    %v1253 = vpop.f32.mrf.mxu0
    %1254 = vmatprep.mubr.bf16.mxu0 0
    %1255 = vmatmul.mubr.bf16.gmra.mxu0 %v1127
    %v1256 = vpop.f32.mrf.mxu0
    %v1257 = vadd.f32 0.0, %v1256
    %v1258 = vpop.f32.mrf.mxu0
    %v1259 = vpop.f32.mrf.mxu0
    %v1260 = vadd.f32 0.0, %v1259
    %v1261 = vpop.f32.mrf.mxu0
    %1262 = vmatprep.mubr.bf16.mxu0 0
    %1263 = vmatmul.mubr.bf16.gmra.mxu0 %v1128
    %v1264 = vpop.f32.mrf.mxu0
    %v1265 = vadd.f32 0.0, %v1264
    %v1266 = vpop.f32.mrf.mxu0
    %v1267 = vpop.f32.mrf.mxu0
    %v1268 = vadd.f32 0.0, %v1267
    %v1269 = vpop.f32.mrf.mxu0
    %1270 = vmatprep.mubr.bf16.mxu0 0
    %1271 = vmatmul.mubr.bf16.gmra.mxu0 %v1129
    %v1272 = vpop.f32.mrf.mxu0
    %v1273 = vadd.f32 0.0, %v1272
    %v1274 = vpop.f32.mrf.mxu0
    %v1275 = vpop.f32.mrf.mxu0
    %v1276 = vadd.f32 0.0, %v1275
    %v1277 = vpop.f32.mrf.mxu0
    %1278 = vmatprep.mubr.bf16.mxu0 0
    %1279 = vmatmul.mubr.bf16.gmra.mxu0 %v1130
    %v1280 = vpop.f32.mrf.mxu0
    %v1281 = vadd.f32 0.0, %v1280
    %v1282 = vpop.f32.mrf.mxu0
    %v1283 = vpop.f32.mrf.mxu0
    %v1284 = vadd.f32 0.0, %v1283
    %v1285 = vpop.f32.mrf.mxu0
    %1286 = vmatprep.mubr.bf16.mxu0 0
    %1287 = vmatmul.mubr.bf16.gmra.mxu0 %v1131
    %v1288 = vpop.f32.mrf.mxu0
    %v1289 = vadd.f32 0.0, %v1288
    %v1290 = vpop.f32.mrf.mxu0
    %v1291 = vpop.f32.mrf.mxu0
    %v1292 = vadd.f32 0.0, %v1291
    %v1293 = vpop.f32.mrf.mxu0
    %1294 = vmatprep.mubr.bf16.mxu0 0
    %1295 = vmatmul.mubr.bf16.gmra.mxu0 %v1132
    %v1296 = vpop.f32.mrf.mxu0
    %v1297 = vadd.f32 0.0, %v1296
    %v1298 = vpop.f32.mrf.mxu0
    %v1299 = vpop.f32.mrf.mxu0
    %v1300 = vadd.f32 0.0, %v1299
    %v1301 = vpop.f32.mrf.mxu0
    %1302 = vmatprep.mubr.bf16.mxu0 0
    %1303 = vmatmul.mubr.bf16.gmra.mxu0 %v1133
    %v1304 = vpop.f32.mrf.mxu0
    %v1305 = vadd.f32 0.0, %v1304
    %v1306 = vpop.f32.mrf.mxu0
    %v1307 = vpop.f32.mrf.mxu0
    %v1308 = vadd.f32 0.0, %v1307
    %v1309 = vpop.f32.mrf.mxu0
    %1310 = vmatprep.mubr.bf16.mxu0 0
    %1311 = vmatmul.mubr.bf16.gmra.mxu0 %v1134
    %v1312 = vpop.f32.mrf.mxu0
    %v1313 = vadd.f32 0.0, %v1312
    %v1314 = vpop.f32.mrf.mxu0
    %v1315 = vpop.f32.mrf.mxu0
    %v1316 = vadd.f32 0.0, %v1315
    %v1317 = vpop.f32.mrf.mxu0
    %1318 = vmatprep.mubr.bf16.mxu0 0
    %1319 = vmatmul.mubr.bf16.gmra.mxu0 %v1135
    %v1320 = vpop.f32.mrf.mxu0
    %v1321 = vadd.f32 0.0, %v1320
    %v1322 = vpop.f32.mrf.mxu0
    %v1323 = vpop.f32.mrf.mxu0
    %v1324 = vadd.f32 0.0, %v1323
    %v1325 = vpop.f32.mrf.mxu0
    %1326 = vmatprep.mubr.bf16.mxu0 0
    %1327 = vmatmul.mubr.bf16.gmra.mxu0 %v1136
    %v1328 = vpop.f32.mrf.mxu0
    %v1329 = vadd.f32 0.0, %v1328
    %v1330 = vpop.f32.mrf.mxu0
    %v1331 = vpop.f32.mrf.mxu0
    %v1332 = vadd.f32 0.0, %v1331
    %v1333 = vpop.f32.mrf.mxu0
    %1334 = vmatprep.mubr.bf16.mxu0 0
    %1335 = vmatmul.mubr.bf16.gmra.mxu0 %v1137
    %v1336 = vpop.f32.mrf.mxu0
    %v1337 = vadd.f32 0.0, %v1336
    %v1338 = vpop.f32.mrf.mxu0
    %v1339 = vpop.f32.mrf.mxu0
    %v1340 = vadd.f32 0.0, %v1339
    %v1341 = vpop.f32.mrf.mxu0
    %1342 = vmatprep.mubr.bf16.mxu0 0
    %1343 = vmatmul.mubr.bf16.gmra.mxu0 %v1138
    %v1344 = vpop.f32.mrf.mxu0
    %v1345 = vadd.f32 0.0, %v1344
    %v1346 = vpop.f32.mrf.mxu0
    %v1347 = vpop.f32.mrf.mxu0
    %v1348 = vadd.f32 0.0, %v1347
    %v1349 = vpop.f32.mrf.mxu0
    %1350 = vmatprep.mubr.bf16.mxu0 0
    %1351 = vmatmul.mubr.bf16.gmra.mxu0 %v1139
    %v1352 = vpop.f32.mrf.mxu0
    %v1353 = vadd.f32 0.0, %v1352
    %v1354 = vpop.f32.mrf.mxu0
    %v1355 = vpop.f32.mrf.mxu0
    %v1356 = vadd.f32 0.0, %v1355
    %v1357 = vpop.f32.mrf.mxu0
    %1358 = vmatprep.mubr.bf16.mxu0 0
    %1359 = vmatmul.mubr.bf16.gmra.mxu0 %v1140
    %v1360 = vpop.f32.mrf.mxu0
    %v1361 = vadd.f32 0.0, %v1360
    %v1362 = vpop.f32.mrf.mxu0
    %v1363 = vpop.f32.mrf.mxu0
    %v1364 = vadd.f32 0.0, %v1363
    %v1365 = vpop.f32.mrf.mxu0
    %1366 = vdwg.mxu0
    %vm1367 = vcmask 261120
    %v1368 = vsel %vm1367, %v1241, 0.0
    %v1369 = vsel %vm1367, %v1244, 0.0
    %v1370 = vadd.f32 %v1368, %v1369
    %v1371 = vsel %vm1367, %v1249, 0.0
    %v1372 = vadd.f32 %v1370, %v1371
    %v1373 = vsel %vm1367, %v1252, 0.0
    %v1374 = vadd.f32 %v1372, %v1373
    %v1375 = vsel %vm1367, %v1257, 0.0
    %v1376 = vadd.f32 %v1374, %v1375
    %v1377 = vsel %vm1367, %v1260, 0.0
    %v1378 = vadd.f32 %v1376, %v1377
    %v1379 = vsel %vm1367, %v1265, 0.0
    %v1380 = vadd.f32 %v1378, %v1379
    %v1381 = vsel %vm1367, %v1268, 0.0
    %v1382 = vadd.f32 %v1380, %v1381
    %v1383 = vsel %vm1367, %v1273, 0.0
    %v1384 = vadd.f32 %v1382, %v1383
    %v1385 = vsel %vm1367, %v1276, 0.0
    %v1386 = vadd.f32 %v1384, %v1385
    %v1387 = vsel %vm1367, %v1281, 0.0
    %v1388 = vadd.f32 %v1386, %v1387
    %v1389 = vsel %vm1367, %v1284, 0.0
    %v1390 = vadd.f32 %v1388, %v1389
    %v1391 = vsel %vm1367, %v1289, 0.0
    %v1392 = vadd.f32 %v1390, %v1391
    %v1393 = vsel %vm1367, %v1292, 0.0
    %v1394 = vadd.f32 %v1392, %v1393
    %v1395 = vsel %vm1367, %v1297, 0.0
    %v1396 = vadd.f32 %v1394, %v1395
    %v1397 = vsel %vm1367, %v1300, 0.0
    %v1398 = vadd.f32 %v1396, %v1397
    %v1399 = vsel %vm1367, %v1305, 0.0
    %v1400 = vadd.f32 %v1398, %v1399
    %v1401 = vsel %vm1367, %v1308, 0.0
    %v1402 = vadd.f32 %v1400, %v1401
    %v1403 = vsel %vm1367, %v1313, 0.0
    %v1404 = vadd.f32 %v1402, %v1403
    %v1405 = vsel %vm1367, %v1316, 0.0
    %v1406 = vadd.f32 %v1404, %v1405
    %v1407 = vsel %vm1367, %v1321, 0.0
    %v1408 = vadd.f32 %v1406, %v1407
    %v1409 = vsel %vm1367, %v1324, 0.0
    %v1410 = vadd.f32 %v1408, %v1409
    %v1411 = vsel %vm1367, %v1329, 0.0
    %v1412 = vadd.f32 %v1410, %v1411
    %v1413 = vsel %vm1367, %v1332, 0.0
    %v1414 = vadd.f32 %v1412, %v1413
    %v1415 = vsel %vm1367, %v1337, 0.0
    %v1416 = vadd.f32 %v1414, %v1415
    %v1417 = vsel %vm1367, %v1340, 0.0
    %v1418 = vadd.f32 %v1416, %v1417
    %v1419 = vsel %vm1367, %v1345, 0.0
    %v1420 = vadd.f32 %v1418, %v1419
    %v1421 = vsel %vm1367, %v1348, 0.0
    %v1422 = vadd.f32 %v1420, %v1421
    %v1423 = vsel %vm1367, %v1353, 0.0
    %v1424 = vadd.f32 %v1422, %v1423
    %v1425 = vsel %vm1367, %v1356, 0.0
    %v1426 = vadd.f32 %v1424, %v1425
    %v1427 = vsel %vm1367, %v1361, 0.0
    %v1428 = vadd.f32 %v1426, %v1427
    %v1429 = vsel %vm1367, %v1364, 0.0
    %v1430 = vadd.f32 %v1428, %v1429
    %v1431 = vrot.slane %v1430, 4
    %v1432 = vadd.f32 %v1430, %v1431
    %v1433 = vrot.slane %v1432, 2
    %v1434 = vadd.f32 %v1432, %v1433
    %v1435 = vrot.slane %v1434, 1
    %v1436 = vadd.f32 %v1434, %v1435
    %v1437 = vmul.f32 %v1436, 0.00390625
    %v1438 = vmul.f32 %v1241, %v1241
    %v1439 = vmul.f32 %v1244, %v1244
    %v1440 = vmul.f32 %v1249, %v1249
    %v1441 = vmul.f32 %v1252, %v1252
    %v1442 = vmul.f32 %v1257, %v1257
    %v1443 = vmul.f32 %v1260, %v1260
    %v1444 = vmul.f32 %v1265, %v1265
    %v1445 = vmul.f32 %v1268, %v1268
    %v1446 = vmul.f32 %v1273, %v1273
    %v1447 = vmul.f32 %v1276, %v1276
    %v1448 = vmul.f32 %v1281, %v1281
    %v1449 = vmul.f32 %v1284, %v1284
    %v1450 = vmul.f32 %v1289, %v1289
    %v1451 = vmul.f32 %v1292, %v1292
    %v1452 = vmul.f32 %v1297, %v1297
    %v1453 = vmul.f32 %v1300, %v1300
    %v1454 = vmul.f32 %v1305, %v1305
    %v1455 = vmul.f32 %v1308, %v1308
    %v1456 = vmul.f32 %v1313, %v1313
    %v1457 = vmul.f32 %v1316, %v1316
    %v1458 = vmul.f32 %v1321, %v1321
    %v1459 = vmul.f32 %v1324, %v1324
    %v1460 = vmul.f32 %v1329, %v1329
    %v1461 = vmul.f32 %v1332, %v1332
    %v1462 = vmul.f32 %v1337, %v1337
    %v1463 = vmul.f32 %v1340, %v1340
    %v1464 = vmul.f32 %v1345, %v1345
    %v1465 = vmul.f32 %v1348, %v1348
    %v1466 = vmul.f32 %v1353, %v1353
    %v1467 = vmul.f32 %v1356, %v1356
    %v1468 = vmul.f32 %v1361, %v1361
    %v1469 = vmul.f32 %v1364, %v1364
    %v1470 = vsel %vm1367, %v1438, 0.0
    %v1471 = vsel %vm1367, %v1439, 0.0
    %v1472 = vadd.f32 %v1470, %v1471
    %v1473 = vsel %vm1367, %v1440, 0.0
    %v1474 = vadd.f32 %v1472, %v1473
    %v1475 = vsel %vm1367, %v1441, 0.0
    %v1476 = vadd.f32 %v1474, %v1475
    %v1477 = vsel %vm1367, %v1442, 0.0
    %v1478 = vadd.f32 %v1476, %v1477
    %v1479 = vsel %vm1367, %v1443, 0.0
    %v1480 = vadd.f32 %v1478, %v1479
    %v1481 = vsel %vm1367, %v1444, 0.0
    %v1482 = vadd.f32 %v1480, %v1481
    %v1483 = vsel %vm1367, %v1445, 0.0
    %v1484 = vadd.f32 %v1482, %v1483
    %v1485 = vsel %vm1367, %v1446, 0.0
    %v1486 = vadd.f32 %v1484, %v1485
    %v1487 = vsel %vm1367, %v1447, 0.0
    %v1488 = vadd.f32 %v1486, %v1487
    %v1489 = vsel %vm1367, %v1448, 0.0
    %v1490 = vadd.f32 %v1488, %v1489
    %v1491 = vsel %vm1367, %v1449, 0.0
    %v1492 = vadd.f32 %v1490, %v1491
    %v1493 = vsel %vm1367, %v1450, 0.0
    %v1494 = vadd.f32 %v1492, %v1493
    %v1495 = vsel %vm1367, %v1451, 0.0
    %v1496 = vadd.f32 %v1494, %v1495
    %v1497 = vsel %vm1367, %v1452, 0.0
    %v1498 = vadd.f32 %v1496, %v1497
    %v1499 = vsel %vm1367, %v1453, 0.0
    %v1500 = vadd.f32 %v1498, %v1499
    %v1501 = vsel %vm1367, %v1454, 0.0
    %v1502 = vadd.f32 %v1500, %v1501
    %v1503 = vsel %vm1367, %v1455, 0.0
    %v1504 = vadd.f32 %v1502, %v1503
    %v1505 = vsel %vm1367, %v1456, 0.0
    %v1506 = vadd.f32 %v1504, %v1505
    %v1507 = vsel %vm1367, %v1457, 0.0
    %v1508 = vadd.f32 %v1506, %v1507
    %v1509 = vsel %vm1367, %v1458, 0.0
    %v1510 = vadd.f32 %v1508, %v1509
    %v1511 = vsel %vm1367, %v1459, 0.0
    %v1512 = vadd.f32 %v1510, %v1511
    %v1513 = vsel %vm1367, %v1460, 0.0
    %v1514 = vadd.f32 %v1512, %v1513
    %v1515 = vsel %vm1367, %v1461, 0.0
    %v1516 = vadd.f32 %v1514, %v1515
    %v1517 = vsel %vm1367, %v1462, 0.0
    %v1518 = vadd.f32 %v1516, %v1517
    %v1519 = vsel %vm1367, %v1463, 0.0
    %v1520 = vadd.f32 %v1518, %v1519
    %v1521 = vsel %vm1367, %v1464, 0.0
    %v1522 = vadd.f32 %v1520, %v1521
    %v1523 = vsel %vm1367, %v1465, 0.0
    %v1524 = vadd.f32 %v1522, %v1523
    %v1525 = vsel %vm1367, %v1466, 0.0
    %v1526 = vadd.f32 %v1524, %v1525
    %v1527 = vsel %vm1367, %v1467, 0.0
    %v1528 = vadd.f32 %v1526, %v1527
    %v1529 = vsel %vm1367, %v1468, 0.0
    %v1530 = vadd.f32 %v1528, %v1529
    %v1531 = vsel %vm1367, %v1469, 0.0
    %v1532 = vadd.f32 %v1530, %v1531
    %v1533 = vrot.slane %v1532, 4
    %v1534 = vadd.f32 %v1532, %v1533
    %v1535 = vrot.slane %v1534, 2
    %v1536 = vadd.f32 %v1534, %v1535
    %v1537 = vrot.slane %v1536, 1
    %v1538 = vadd.f32 %v1536, %v1537
    %v1539 = vmul.f32 %v1538, 0.00390625
    %v1540 = vmul.f32 %v1437, %v1437
    %v1541 = vsub.f32 %v1539, %v1540
    %v1542 = vmax.f32 %v1541, 0.0
    %v1543 = vadd.f32 %v1542, 1e-05
    %v1544 = vrsqrt.pop %v1543
    %v1545 = vmul.f32 %v1157, %v1544
    %v1546 = vmul.f32 %v1437, %v1545
    %v1548 = vrot.slane %v1546, 7
    %v1550 = vsub.f32 %v1157, %v1548
    %v1551 = vlaneseq
    %v1552 = vshrl.u32 %v1551, 7
    %v1553 = vsub.s32 0, %v1552
    %v1554 = vrot.slane %v1545, %v1553
    %v1555 = vmul.f32 %v1241, %v1554
    %v1556 = vmul.f32 %v1244, %v1554
    %v1557 = vmul.f32 %v1249, %v1554
    %v1558 = vmul.f32 %v1252, %v1554
    %v1559 = vmul.f32 %v1257, %v1554
    %v1560 = vmul.f32 %v1260, %v1554
    %v1561 = vmul.f32 %v1265, %v1554
    %v1562 = vmul.f32 %v1268, %v1554
    %v1563 = vmul.f32 %v1273, %v1554
    %v1564 = vmul.f32 %v1276, %v1554
    %v1565 = vmul.f32 %v1281, %v1554
    %v1566 = vmul.f32 %v1284, %v1554
    %v1567 = vmul.f32 %v1289, %v1554
    %v1568 = vmul.f32 %v1292, %v1554
    %v1569 = vmul.f32 %v1297, %v1554
    %v1570 = vmul.f32 %v1300, %v1554
    %v1571 = vmul.f32 %v1305, %v1554
    %v1572 = vmul.f32 %v1308, %v1554
    %v1573 = vmul.f32 %v1313, %v1554
    %v1574 = vmul.f32 %v1316, %v1554
    %v1575 = vmul.f32 %v1321, %v1554
    %v1576 = vmul.f32 %v1324, %v1554
    %v1577 = vmul.f32 %v1329, %v1554
    %v1578 = vmul.f32 %v1332, %v1554
    %v1579 = vmul.f32 %v1337, %v1554
    %v1580 = vmul.f32 %v1340, %v1554
    %v1581 = vmul.f32 %v1345, %v1554
    %v1582 = vmul.f32 %v1348, %v1554
    %v1583 = vmul.f32 %v1353, %v1554
    %v1584 = vmul.f32 %v1356, %v1554
    %v1585 = vmul.f32 %v1361, %v1554
    %v1586 = vmul.f32 %v1364, %v1554
    %v1587 = vlaneseq
    %v1588 = vshrl.u32 %v1587, 7
    %v1589 = vsub.s32 1, %v1588
    %v1590 = vrot.slane %v1550, %v1589
    %v1591 = vadd.f32 %v1555, %v1590
    %v1592 = vadd.f32 %v1556, %v1590
    %v1593 = vadd.f32 %v1557, %v1590
    %v1594 = vadd.f32 %v1558, %v1590
    %v1595 = vadd.f32 %v1559, %v1590
    %v1596 = vadd.f32 %v1560, %v1590
    %v1597 = vadd.f32 %v1561, %v1590
    %v1598 = vadd.f32 %v1562, %v1590
    %v1599 = vadd.f32 %v1563, %v1590
    %v1600 = vadd.f32 %v1564, %v1590
    %v1601 = vadd.f32 %v1565, %v1590
    %v1602 = vadd.f32 %v1566, %v1590
    %v1603 = vadd.f32 %v1567, %v1590
    %v1604 = vadd.f32 %v1568, %v1590
    %v1605 = vadd.f32 %v1569, %v1590
    %v1606 = vadd.f32 %v1570, %v1590
    %v1607 = vadd.f32 %v1571, %v1590
    %v1608 = vadd.f32 %v1572, %v1590
    %v1609 = vadd.f32 %v1573, %v1590
    %v1610 = vadd.f32 %v1574, %v1590
    %v1611 = vadd.f32 %v1575, %v1590
    %v1612 = vadd.f32 %v1576, %v1590
    %v1613 = vadd.f32 %v1577, %v1590
    %v1614 = vadd.f32 %v1578, %v1590
    %v1615 = vadd.f32 %v1579, %v1590
    %v1616 = vadd.f32 %v1580, %v1590
    %v1617 = vadd.f32 %v1581, %v1590
    %v1618 = vadd.f32 %v1582, %v1590
    %v1619 = vadd.f32 %v1583, %v1590
    %v1620 = vadd.f32 %v1584, %v1590
    %v1621 = vadd.f32 %v1585, %v1590
    %v1622 = vadd.f32 %v1586, %v1590
    %v1623 = vmax.f32 %v1591, 0.0
    %v1624 = vmax.f32 %v1592, 0.0
    %v1625 = vmax.f32 %v1593, 0.0
    %v1626 = vmax.f32 %v1594, 0.0
    %v1627 = vmax.f32 %v1595, 0.0
    %v1628 = vmax.f32 %v1596, 0.0
    %v1629 = vmax.f32 %v1597, 0.0
    %v1630 = vmax.f32 %v1598, 0.0
    %v1631 = vmax.f32 %v1599, 0.0
    %v1632 = vmax.f32 %v1600, 0.0
    %v1633 = vmax.f32 %v1601, 0.0
    %v1634 = vmax.f32 %v1602, 0.0
    %v1635 = vmax.f32 %v1603, 0.0
    %v1636 = vmax.f32 %v1604, 0.0
    %v1637 = vmax.f32 %v1605, 0.0
    %v1638 = vmax.f32 %v1606, 0.0
    %v1639 = vmax.f32 %v1607, 0.0
    %v1640 = vmax.f32 %v1608, 0.0
    %v1641 = vmax.f32 %v1609, 0.0
    %v1642 = vmax.f32 %v1610, 0.0
    %v1643 = vmax.f32 %v1611, 0.0
    %v1644 = vmax.f32 %v1612, 0.0
    %v1645 = vmax.f32 %v1613, 0.0
    %v1646 = vmax.f32 %v1614, 0.0
    %v1647 = vmax.f32 %v1615, 0.0
    %v1648 = vmax.f32 %v1616, 0.0
    %v1649 = vmax.f32 %v1617, 0.0
    %v1650 = vmax.f32 %v1618, 0.0
    %v1651 = vmax.f32 %v1619, 0.0
    %v1652 = vmax.f32 %v1620, 0.0
    %v1653 = vmax.f32 %v1621, 0.0
    %v1654 = vmax.f32 %v1622, 0.0
    %v1655 = vsel %vm1367, %v1623, -inf
    %v1656 = vsel %vm1367, %v1624, -inf
    %v1657 = vmax.f32 %v1655, %v1656
    %v1658 = vrot.slane %v1657, 4
    %v1659 = vmax.f32 %v1657, %v1658
    %v1660 = vrot.slane %v1659, 2
    %v1661 = vmax.f32 %v1659, %v1660
    %v1662 = vrot.slane %v1661, 1
    %v1663 = vmax.f32 %v1661, %v1662
    %v1664 = vsel %vm1367, %v1625, -inf
    %v1665 = vsel %vm1367, %v1626, -inf
    %v1666 = vmax.f32 %v1664, %v1665
    %v1667 = vrot.slane %v1666, 4
    %v1668 = vmax.f32 %v1666, %v1667
    %v1669 = vrot.slane %v1668, 2
    %v1670 = vmax.f32 %v1668, %v1669
    %v1671 = vrot.slane %v1670, 1
    %v1672 = vmax.f32 %v1670, %v1671
    %v1673 = vsel %vm1367, %v1627, -inf
    %v1674 = vsel %vm1367, %v1628, -inf
    %v1675 = vmax.f32 %v1673, %v1674
    %v1676 = vrot.slane %v1675, 4
    %v1677 = vmax.f32 %v1675, %v1676
    %v1678 = vrot.slane %v1677, 2
    %v1679 = vmax.f32 %v1677, %v1678
    %v1680 = vrot.slane %v1679, 1
    %v1681 = vmax.f32 %v1679, %v1680
    %v1682 = vsel %vm1367, %v1629, -inf
    %v1683 = vsel %vm1367, %v1630, -inf
    %v1684 = vmax.f32 %v1682, %v1683
    %v1685 = vrot.slane %v1684, 4
    %v1686 = vmax.f32 %v1684, %v1685
    %v1687 = vrot.slane %v1686, 2
    %v1688 = vmax.f32 %v1686, %v1687
    %v1689 = vrot.slane %v1688, 1
    %v1690 = vmax.f32 %v1688, %v1689
    %v1691 = vsel %vm1367, %v1631, -inf
    %v1692 = vsel %vm1367, %v1632, -inf
    %v1693 = vmax.f32 %v1691, %v1692
    %v1694 = vrot.slane %v1693, 4
    %v1695 = vmax.f32 %v1693, %v1694
    %v1696 = vrot.slane %v1695, 2
    %v1697 = vmax.f32 %v1695, %v1696
    %v1698 = vrot.slane %v1697, 1
    %v1699 = vmax.f32 %v1697, %v1698
    %v1700 = vsel %vm1367, %v1633, -inf
    %v1701 = vsel %vm1367, %v1634, -inf
    %v1702 = vmax.f32 %v1700, %v1701
    %v1703 = vrot.slane %v1702, 4
    %v1704 = vmax.f32 %v1702, %v1703
    %v1705 = vrot.slane %v1704, 2
    %v1706 = vmax.f32 %v1704, %v1705
    %v1707 = vrot.slane %v1706, 1
    %v1708 = vmax.f32 %v1706, %v1707
    %v1709 = vsel %vm1367, %v1635, -inf
    %v1710 = vsel %vm1367, %v1636, -inf
    %v1711 = vmax.f32 %v1709, %v1710
    %v1712 = vrot.slane %v1711, 4
    %v1713 = vmax.f32 %v1711, %v1712
    %v1714 = vrot.slane %v1713, 2
    %v1715 = vmax.f32 %v1713, %v1714
    %v1716 = vrot.slane %v1715, 1
    %v1717 = vmax.f32 %v1715, %v1716
    %v1718 = vsel %vm1367, %v1637, -inf
    %v1719 = vsel %vm1367, %v1638, -inf
    %v1720 = vmax.f32 %v1718, %v1719
    %v1721 = vrot.slane %v1720, 4
    %v1722 = vmax.f32 %v1720, %v1721
    %v1723 = vrot.slane %v1722, 2
    %v1724 = vmax.f32 %v1722, %v1723
    %v1725 = vrot.slane %v1724, 1
    %v1726 = vmax.f32 %v1724, %v1725
    %v1727 = vsel %vm1367, %v1639, -inf
    %v1728 = vsel %vm1367, %v1640, -inf
    %v1729 = vmax.f32 %v1727, %v1728
    %v1730 = vrot.slane %v1729, 4
    %v1731 = vmax.f32 %v1729, %v1730
    %v1732 = vrot.slane %v1731, 2
    %v1733 = vmax.f32 %v1731, %v1732
    %v1734 = vrot.slane %v1733, 1
    %v1735 = vmax.f32 %v1733, %v1734
    %v1736 = vsel %vm1367, %v1641, -inf
    %v1737 = vsel %vm1367, %v1642, -inf
    %v1738 = vmax.f32 %v1736, %v1737
    %v1739 = vrot.slane %v1738, 4
    %v1740 = vmax.f32 %v1738, %v1739
    %v1741 = vrot.slane %v1740, 2
    %v1742 = vmax.f32 %v1740, %v1741
    %v1743 = vrot.slane %v1742, 1
    %v1744 = vmax.f32 %v1742, %v1743
    %v1745 = vsel %vm1367, %v1643, -inf
    %v1746 = vsel %vm1367, %v1644, -inf
    %v1747 = vmax.f32 %v1745, %v1746
    %v1748 = vrot.slane %v1747, 4
    %v1749 = vmax.f32 %v1747, %v1748
    %v1750 = vrot.slane %v1749, 2
    %v1751 = vmax.f32 %v1749, %v1750
    %v1752 = vrot.slane %v1751, 1
    %v1753 = vmax.f32 %v1751, %v1752
    %v1754 = vsel %vm1367, %v1645, -inf
    %v1755 = vsel %vm1367, %v1646, -inf
    %v1756 = vmax.f32 %v1754, %v1755
    %v1757 = vrot.slane %v1756, 4
    %v1758 = vmax.f32 %v1756, %v1757
    %v1759 = vrot.slane %v1758, 2
    %v1760 = vmax.f32 %v1758, %v1759
    %v1761 = vrot.slane %v1760, 1
    %v1762 = vmax.f32 %v1760, %v1761
    %v1763 = vsel %vm1367, %v1647, -inf
    %v1764 = vsel %vm1367, %v1648, -inf
    %v1765 = vmax.f32 %v1763, %v1764
    %v1766 = vrot.slane %v1765, 4
    %v1767 = vmax.f32 %v1765, %v1766
    %v1768 = vrot.slane %v1767, 2
    %v1769 = vmax.f32 %v1767, %v1768
    %v1770 = vrot.slane %v1769, 1
    %v1771 = vmax.f32 %v1769, %v1770
    %v1772 = vsel %vm1367, %v1649, -inf
    %v1773 = vsel %vm1367, %v1650, -inf
    %v1774 = vmax.f32 %v1772, %v1773
    %v1775 = vrot.slane %v1774, 4
    %v1776 = vmax.f32 %v1774, %v1775
    %v1777 = vrot.slane %v1776, 2
    %v1778 = vmax.f32 %v1776, %v1777
    %v1779 = vrot.slane %v1778, 1
    %v1780 = vmax.f32 %v1778, %v1779
    %v1781 = vsel %vm1367, %v1651, -inf
    %v1782 = vsel %vm1367, %v1652, -inf
    %v1783 = vmax.f32 %v1781, %v1782
    %v1784 = vrot.slane %v1783, 4
    %v1785 = vmax.f32 %v1783, %v1784
    %v1786 = vrot.slane %v1785, 2
    %v1787 = vmax.f32 %v1785, %v1786
    %v1788 = vrot.slane %v1787, 1
    %v1789 = vmax.f32 %v1787, %v1788
    %v1790 = vsel %vm1367, %v1653, -inf
    %v1791 = vsel %vm1367, %v1654, -inf
    %v1792 = vmax.f32 %v1790, %v1791
    %v1793 = vrot.slane %v1792, 4
    %v1794 = vmax.f32 %v1792, %v1793
    %v1795 = vrot.slane %v1794, 2
    %v1796 = vmax.f32 %v1794, %v1795
    %v1797 = vrot.slane %v1796, 1
    %v1798 = vmax.f32 %v1796, %v1797
    %vm1815 = vcmask 1041409
    %v1816 = vsel %vm1815, %v1672, %v1663
    %vm1817 = vcmask 1042434
    %v1818 = vsel %vm1817, %v1681, %v1816
    %vm1819 = vcmask 1043459
    %v1820 = vsel %vm1819, %v1690, %v1818
    %vm1821 = vcmask 1044484
    %v1822 = vsel %vm1821, %v1699, %v1820
    %vm1823 = vcmask 1045509
    %v1824 = vsel %vm1823, %v1708, %v1822
    %vm1825 = vcmask 1046534
    %v1826 = vsel %vm1825, %v1717, %v1824
    %vm1827 = vcmask 1047559
    %v1828 = vsel %vm1827, %v1726, %v1826
    %v1829 = vsel %vm1815, %v1744, %v1735
    %v1830 = vsel %vm1817, %v1753, %v1829
    %v1831 = vsel %vm1819, %v1762, %v1830
    %v1832 = vsel %vm1821, %v1771, %v1831
    %v1833 = vsel %vm1823, %v1780, %v1832
    %v1834 = vsel %vm1825, %v1789, %v1833
    %v1835 = vsel %vm1827, %v1798, %v1834
    %1838 = vst.msk [vmem:[#allocation2] sm:$0xff] %vm1367, %v1828
    %1839 = vst.msk [vmem:[#allocation2 + $0x8] sm:$0xff] %vm1367, %v1835
    // Predicated region
    $region30: #{_forward.1} parent=1 // pred_check
      _
    $region31: #{_forward.1} parent=1 // pred_check_branch
      %1841 = sbr.rel (0) target = $region33
    $region32: #{_forward.1} parent=1 // pred_region
      %s1843 = ssub.s32 256, 256
      %1844 = vsyncadd [#allocation3], %s1843
      %s1845 = sshll.u32 [#allocation2], 4
      %s1846 = int_to_ptr.vmem [resolvable:$true] %s1845
      %1851 = dma.vmem_to_hbm [thread:$0]  %s1846, 256, %s7, [#allocation3], 128, 128, 8
    $region33: #{_forward.1} parent=1 // pred_fallthru
      _
    // Predicated region
    $region34: #{_forward.1} parent=1 // pred_check
      _
    $region35: #{_forward.1} parent=1 // pred_check_branch
      %1853 = sbr.rel (0) target = $region37
    $region36: #{_forward.1} parent=1 // pred_region
      %1854 = dma.done [#allocation3], 256
    $region37: #{_forward.1} parent=1 // pred_fallthru
      _
    %1855 = vsyncpa [#allocation3], 1

</llo_original>
